<compile_context>
chip_gen: v6e
topology: v6e:2x2x1
jax: 0.10.0
libtpu: 0.0.40
codegen_flags: <defaults>
</compile_context>

<pallas_src>
import math
import functools

import jax
import jax.numpy as jnp
import numpy as np
from jax import lax
from jax.experimental import pallas as pl
from jax.experimental.pallas import tpu as pltpu


def _mha_kernel(q_ref, k_ref, v_ref,
                wq_ref, bq_ref, wk_ref, bk_ref, wv_ref, bv_ref,
                out_ref, kh_scr, vh_scr,
                *, num_heads, d_k, d_v, mxu_dtype):
    """One (batch, q-tile) grid step.

    kh_scr/vh_scr are persistent VMEM caches of the per-head K/V projections
    for the current batch; they are (re)computed only on the first q-tile of
    each batch.
    """
    inv_sqrt_dk = 1.0 / math.sqrt(d_k)

    # ---- per-batch K/V projection, cached across all q-tiles of this batch --
    @pl.when(pl.program_id(1) == 0)
    def _project_kv():
        k_tok = k_ref[0].astype(mxu_dtype)                       # (T, d_model)
        v_tok = v_ref[0].astype(mxu_dtype)
        kh_all = (jnp.dot(k_tok, wk_ref[...],
                          preferred_element_type=jnp.float32)
                  + bk_ref[...]).astype(mxu_dtype)               # (T, H*d_k)
        vh_all = (jnp.dot(v_tok, wv_ref[...],
                          preferred_element_type=jnp.float32)
                  + bv_ref[...]).astype(mxu_dtype)               # (T, H*d_v)
        # Head split is paid once per batch here, not once per q-tile.
        for h in range(num_heads):                               # static unroll
            kh_scr[h] = kh_all[:, h * d_k:(h + 1) * d_k]
            vh_scr[h] = vh_all[:, h * d_v:(h + 1) * d_v]

    # ---- per-q-tile work -----------------------------------------------------
    q_tok = q_ref[0].astype(mxu_dtype)                           # (TQ, d_model)
    # Fused all-head Q projection (one wide MXU matmul); 1/sqrt(d_k) folded in
    # on the (TQ, H*d_k) tile instead of the (TQ, T) scores.
    qh_all = ((jnp.dot(q_tok, wq_ref[...],
                       preferred_element_type=jnp.float32)
               + bq_ref[...]) * inv_sqrt_dk).astype(mxu_dtype)   # (TQ, H*d_k)

    for h in range(num_heads):                                   # static unroll
        qh = qh_all[:, h * d_k:(h + 1) * d_k]                    # (TQ, d_k)
        kh = kh_scr[h]                                           # (T,  d_k)
        vh = vh_scr[h]                                           # (T,  d_v)

        # scores = qh @ kh^T: contract last dims, no transposed K tile.
        scores = lax.dot_general(
            qh, kh, dimension_numbers=(((1,), (1,)), ((), ())),
            preferred_element_type=jnp.float32)                  # (TQ, T) f32

        # Numerically stable softmax, all in f32.  Normalization is applied to
        # the small (TQ, d_v) output below, not to the (TQ, T) probabilities.
        m = jnp.max(scores, axis=-1, keepdims=True)
        p = jnp.exp(scores - m)                                  # (TQ, T) f32
        denom = jnp.sum(p, axis=-1, keepdims=True)               # (TQ, 1)

        o = jnp.dot(p.astype(mxu_dtype), vh,
                    preferred_element_type=jnp.float32)          # (TQ, d_v)
        o = o * pl.reciprocal(denom, approx=True)                # EUP slot

        # Write this head's slice of the merged-heads slab; the whole
        # (1, TQ, H*d_v) block goes back to HBM as a single lane-dense store.
        out_ref[0, :, h * d_v:(h + 1) * d_v] = o.astype(out_ref.dtype)


def multi_headed_attention(keys, queries, values, params, *,
                           num_heads, d_k, d_v, q_tile=256,
                           mxu_dtype=jnp.bfloat16):
    """keys/queries/values: (B, T, d_model). Returns (B, T, H*d_v)."""
    B, T, d_model = queries.shape
    assert keys.shape == queries.shape == values.shape
    TQ = min(q_tile, T)
    assert T % TQ == 0, "T must be divisible by the query tile"
    n_q = T // TQ
    hk, hv = num_heads * d_k, num_heads * d_v

    # Pre-cast weights to the MXU operand dtype (halves weight DMA/VMEM for
    # bf16, removes the per-step in-kernel cast). Biases stay f32: they are
    # added to the f32 accumulators.
    wq = params["wq"].astype(mxu_dtype)
    wk = params["wk"].astype(mxu_dtype)
    wv = params["wv"].astype(mxu_dtype)
    bq = params["bq"].astype(jnp.float32)
    bk = params["bk"].astype(jnp.float32)
    bv = params["bv"].astype(jnp.float32)

    # Operands whose block index never changes along the q axis are
    # single-buffered: double-buffering them is pure VMEM waste.
    one_buf = pl.Buffered(1)
    q_spec = pl.BlockSpec((1, TQ, d_model), lambda b, i: (b, i, 0))
    kv_spec = pl.BlockSpec((1, T, d_model), lambda b, i: (b, 0, 0),
                           pipeline_mode=one_buf)
    wqk_spec = pl.BlockSpec((d_model, hk), lambda b, i: (0, 0),
                            pipeline_mode=one_buf)
    wv_spec = pl.BlockSpec((d_model, hv), lambda b, i: (0, 0),
                           pipeline_mode=one_buf)
    bqk_spec = pl.BlockSpec((1, hk), lambda b, i: (0, 0), pipeline_mode=one_buf)
    bv_spec = pl.BlockSpec((1, hv), lambda b, i: (0, 0), pipeline_mode=one_buf)
    out_spec = pl.BlockSpec((1, TQ, hv), lambda b, i: (b, i, 0))

    kernel = functools.partial(_mha_kernel, num_heads=num_heads,
                               d_k=d_k, d_v=d_v, mxu_dtype=mxu_dtype)

    in_bytes = np.dtype(queries.dtype).itemsize
    w_bytes = np.dtype(mxu_dtype).itemsize
    # Rough per-step VMEM footprint: blocks + persistent scratch + in-body
    # intermediates; double the estimate for headroom, clamp to 64 MiB (safe
    # on v5e/v6e/v7x).
    est = (2 * TQ * d_model * in_bytes                 # q block (double buffered)
           + 2 * T * d_model * in_bytes                # k + v blocks (single buf)
           + (2 * d_model * hk + d_model * hv) * w_bytes
           + (2 * hk + hv) * 4                         # biases
           + 2 * TQ * hv * 4                           # out block (double buffered)
           + (T * hk + T * hv) * w_bytes               # kh/vh scratch
           + 4 * TQ * T * 4 + 2 * T * hk * 4)          # scores/p + projection temps
    vmem_limit = int(min(max(2 * est, 32 * 2 ** 20), 64 * 2 ** 20))

    cost = pl.CostEstimate(
        flops=int(2 * B * T * d_model * (2 * hk + hv)            # projections
                  + 2 * B * num_heads * T * T * (d_k + d_v)),    # attention
        transcendentals=int(B * num_heads * T * T),              # exp
        bytes_accessed=int(3 * B * T * d_model * in_bytes
                           + (2 * d_model * hk + d_model * hv) * w_bytes
                           + (2 * hk + hv) * 4
                           + B * T * hv * in_bytes),
    )

    return pl.pallas_call(
        kernel,
        out_shape=jax.ShapeDtypeStruct((B, T, hv), queries.dtype),
        grid_spec=pltpu.PrefetchScalarGridSpec(
            num_scalar_prefetch=0,
            grid=(B, n_q),
            in_specs=[q_spec, kv_spec, kv_spec,
                      wqk_spec, bqk_spec,
                      wqk_spec, bqk_spec,
                      wv_spec, bv_spec],
            out_specs=out_spec,
            scratch_shapes=[pltpu.VMEM((num_heads, T, d_k), mxu_dtype),
                            pltpu.VMEM((num_heads, T, d_v), mxu_dtype)],
        ),
        compiler_params=pltpu.CompilerParams(
            # q axis must be "arbitrary": the cached K/V projections require the
            # first q-tile of each batch to run before the rest (per core).
            dimension_semantics=("parallel", "arbitrary"),
            vmem_limit_bytes=vmem_limit),
        cost_estimate=cost,
    )(queries, keys, values, wq, bq, wk, bk, wv, bv)


def init_params(key, num_heads, d_model, d_k, d_v):
    """Deterministic init matching nn.Linear defaults; stored pre-fused as
    (d_model, H*dh) weights and (1, H*dh) biases (kernel layout), f32."""
    def linear(k, in_f, out_f):
        kw, kb = jax.random.split(k)
        bound = 1.0 / math.sqrt(in_f)
        w = jax.random.uniform(kw, (out_f, in_f), jnp.float32, -bound, bound)
        b = jax.random.uniform(kb, (out_f,), jnp.float32, -bound, bound)
        return w.T, b.reshape(1, -1)          # -> (in_f, out_f), (1, out_f)

    kq, kk, kv = jax.random.split(key, 3)
    wq, bq = linear(kq, d_model, num_heads * d_k)
    wk, bk = linear(kk, d_model, num_heads * d_k)
    wv, bv = linear(kv, d_model, num_heads * d_v)
    return {"wq": wq, "bq": bq, "wk": wk, "bk": bk, "wv": wv, "bv": bv}


def _reference(keys, queries, values, params, num_heads, d_k, d_v):
    """Pure-JAX f32 reference mirroring the PyTorch math."""
    B, T, _ = queries.shape

    def proj(x, w, b, dh):
        y = x @ w + b                                   # (B, T, H*dh)
        return y.reshape(B, T, num_heads, dh).transpose(0, 2, 1, 3)

    q = proj(queries, params["wq"], params["bq"], d_k)
    k = proj(keys, params["wk"], params["bk"], d_k)
    v = proj(values, params["wv"], params["bv"], d_v)
    scores = jnp.einsum("bhik,bhjk->bhij", q, k) / math.sqrt(d_k)
    p = jax.nn.softmax(scores, axis=-1)
    o = jnp.einsum("bhis,bhsv->bhiv", p, v)
    return o.transpose(0, 2, 1, 3).reshape(B, T, num_heads * d_v)


if __name__ == "__main__":
    num_heads, d_model, d_k, d_v = 4, 32, 8, 8
    B, T = 2, 8

    key = jax.random.PRNGKey(0)
    k_params, k_k, k_q, k_v = jax.random.split(key, 4)

    params = init_params(k_params, num_heads, d_model, d_k, d_v)
    keys_in = jax.random.normal(k_k, (B, T, d_model), jnp.float32)
    queries_in = jax.random.normal(k_q, (B, T, d_model), jnp.float32)
    values_in = jax.random.normal(k_v, (B, T, d_model), jnp.float32)

    ref = _reference(keys_in, queries_in, values_in, params, num_heads, d_k, d_v)

    # Default path: bf16 MXU operands (MXU peak on v5e/v6e/v7x), f32 accumulate.
    out_bf16 = multi_headed_attention(keys_in, queries_in, values_in, params,
                                      num_heads=num_heads, d_k=d_k, d_v=d_v)
    out_bf16 = jax.block_until_ready(out_bf16)
    np.testing.assert_allclose(np.asarray(out_bf16), np.asarray(ref),
                               rtol=5e-2, atol=5e-2)

    # f32-operand path: tight numerical check of the kernel structure itself
    # (tolerance still allows pl.reciprocal(approx=True) in the softmax).
    out_f32 = multi_headed_attention(keys_in, queries_in, values_in, params,
                                     num_heads=num_heads, d_k=d_k, d_v=d_v,
                                     mxu_dtype=jnp.float32)
    out_f32 = jax.block_until_ready(out_f32)
    np.testing.assert_allclose(np.asarray(out_f32), np.asarray(ref),
                               rtol=5e-3, atol=1e-3)

    print("KERNEL_OK")
</pallas_src>

<mosaic_0001>
module attributes {stable_mosaic.version = 11 : i64} {
  func.func @_mha_kernel(%arg0: i32, %arg1: i32, %arg2: memref<1x8x32xf32, #tpu.memory_space<vmem>>, %arg3: memref<1x8x32xf32, #tpu.memory_space<vmem>>, %arg4: memref<1x8x32xf32, #tpu.memory_space<vmem>>, %arg5: memref<32x32xbf16, #tpu.memory_space<vmem>>, %arg6: memref<1x32xf32, #tpu.memory_space<vmem>>, %arg7: memref<32x32xbf16, #tpu.memory_space<vmem>>, %arg8: memref<1x32xf32, #tpu.memory_space<vmem>>, %arg9: memref<32x32xbf16, #tpu.memory_space<vmem>>, %arg10: memref<1x32xf32, #tpu.memory_space<vmem>>, %arg11: memref<1x8x32xf32, #tpu.memory_space<vmem>>, %arg12: memref<4x8x8xbf16, #tpu.memory_space<vmem>>, %arg13: memref<4x8x8xbf16, #tpu.memory_space<vmem>>) attributes {dimension_semantics = [#tpu.dimension_semantics<parallel>, #tpu.dimension_semantics<arbitrary>], iteration_bounds = array<i64: 2, 1>, scalar_prefetch = 0 : i64, scratch_operands = 2 : i64, tpu.core_type = #tpu.core_type<tc>, window_params = [{transform_indices = @transform_0, window_bounds = array<i64: 1, 8, 32>}, {pipeline_mode = #tpu.pipeline_mode<synchronous>, transform_indices = @transform_1, window_bounds = array<i64: 1, 8, 32>}, {pipeline_mode = #tpu.pipeline_mode<synchronous>, transform_indices = @transform_2, window_bounds = array<i64: 1, 8, 32>}, {pipeline_mode = #tpu.pipeline_mode<synchronous>, transform_indices = @transform_3, window_bounds = array<i64: 32, 32>}, {pipeline_mode = #tpu.pipeline_mode<synchronous>, transform_indices = @transform_4, window_bounds = array<i64: 1, 32>}, {pipeline_mode = #tpu.pipeline_mode<synchronous>, transform_indices = @transform_5, window_bounds = array<i64: 32, 32>}, {pipeline_mode = #tpu.pipeline_mode<synchronous>, transform_indices = @transform_6, window_bounds = array<i64: 1, 32>}, {pipeline_mode = #tpu.pipeline_mode<synchronous>, transform_indices = @transform_7, window_bounds = array<i64: 32, 32>}, {pipeline_mode = #tpu.pipeline_mode<synchronous>, transform_indices = @transform_8, window_bounds = array<i64: 1, 32>}, {transform_indices = @transform_9, window_bounds = array<i64: 1, 8, 32>}]} {
    %c0_i32 = arith.constant 0 : i32
    %0 = arith.cmpi eq, %arg1, %c0_i32 : i32
    %1 = arith.extui %0 : i1 to i32
    %c0_i32_0 = arith.constant 0 : i32
    %2 = arith.cmpi ne, %1, %c0_i32_0 : i32
    scf.if %2 {
      %c0_54 = arith.constant 0 : index
      %c0_55 = arith.constant 0 : index
      %c0_56 = arith.constant 0 : index
      %98 = vector.load %arg3[%c0_54, %c0_55, %c0_56] : memref<1x8x32xf32, #tpu.memory_space<vmem>>, vector<1x8x32xf32>
      %99 = vector.shape_cast %98 : vector<1x8x32xf32> to vector<8x32xf32>
      %100 = arith.truncf %99 : vector<8x32xf32> to vector<8x32xbf16>
      %c0_57 = arith.constant 0 : index
      %c0_58 = arith.constant 0 : index
      %c0_59 = arith.constant 0 : index
      %101 = vector.load %arg4[%c0_57, %c0_58, %c0_59] : memref<1x8x32xf32, #tpu.memory_space<vmem>>, vector<1x8x32xf32>
      %102 = vector.shape_cast %101 : vector<1x8x32xf32> to vector<8x32xf32>
      %103 = arith.truncf %102 : vector<8x32xf32> to vector<8x32xbf16>
      %c0_60 = arith.constant 0 : index
      %c0_61 = arith.constant 0 : index
      %104 = vector.load %arg7[%c0_60, %c0_61] : memref<32x32xbf16, #tpu.memory_space<vmem>>, vector<32x32xbf16>
      %cst_62 = arith.constant dense<0.000000e+00> : vector<8x32xf32>
      %105 = tpu.matmul %100, %104, %cst_62 {dimension_numbers = #tpu.dot_dimension_numbers<[1], [0], [0], [1], [0, 0, 1, 1], [], []>} : vector<8x32xbf16>, vector<32x32xbf16>, vector<8x32xf32> -> vector<8x32xf32>
      %c0_63 = arith.constant 0 : index
      %c0_64 = arith.constant 0 : index
      %106 = vector.load %arg8[%c0_63, %c0_64] : memref<1x32xf32, #tpu.memory_space<vmem>>, vector<1x32xf32>
      %107 = vector.broadcast %106 : vector<1x32xf32> to vector<8x32xf32>
      %108 = arith.addf %105, %107 : vector<8x32xf32>
      %109 = arith.truncf %108 : vector<8x32xf32> to vector<8x32xbf16>
      %c0_65 = arith.constant 0 : index
      %c0_66 = arith.constant 0 : index
      %110 = vector.load %arg9[%c0_65, %c0_66] : memref<32x32xbf16, #tpu.memory_space<vmem>>, vector<32x32xbf16>
      %cst_67 = arith.constant dense<0.000000e+00> : vector<8x32xf32>
      %111 = tpu.matmul %103, %110, %cst_67 {dimension_numbers = #tpu.dot_dimension_numbers<[1], [0], [0], [1], [0, 0, 1, 1], [], []>} : vector<8x32xbf16>, vector<32x32xbf16>, vector<8x32xf32> -> vector<8x32xf32>
      %c0_68 = arith.constant 0 : index
      %c0_69 = arith.constant 0 : index
      %112 = vector.load %arg10[%c0_68, %c0_69] : memref<1x32xf32, #tpu.memory_space<vmem>>, vector<1x32xf32>
      %113 = vector.broadcast %112 : vector<1x32xf32> to vector<8x32xf32>
      %114 = arith.addf %111, %113 : vector<8x32xf32>
      %115 = arith.truncf %114 : vector<8x32xf32> to vector<8x32xbf16>
      %116 = vector.extract_strided_slice %109 {offsets = [0, 0], sizes = [8, 8], strides = [1, 1]} : vector<8x32xbf16> to vector<8x8xbf16>
      %c0_70 = arith.constant 0 : index
      %c0_71 = arith.constant 0 : index
      %c0_72 = arith.constant 0 : index
      %117 = vector.load %arg12[%c0_70, %c0_71, %c0_72] : memref<4x8x8xbf16, #tpu.memory_space<vmem>>, vector<1x8x8xbf16>
      %118 = vector.shape_cast %117 : vector<1x8x8xbf16> to vector<8x8xbf16>
      %119 = vector.shape_cast %116 : vector<8x8xbf16> to vector<1x8x8xbf16>
      tpu.vector_store %arg12[%c0_70, %c0_71, %c0_72], %119 {strides = array<i32>} : memref<4x8x8xbf16, #tpu.memory_space<vmem>>, vector<1x8x8xbf16>,
      %120 = vector.extract_strided_slice %115 {offsets = [0, 0], sizes = [8, 8], strides = [1, 1]} : vector<8x32xbf16> to vector<8x8xbf16>
      %c0_73 = arith.constant 0 : index
      %c0_74 = arith.constant 0 : index
      %c0_75 = arith.constant 0 : index
      %121 = vector.load %arg13[%c0_73, %c0_74, %c0_75] : memref<4x8x8xbf16, #tpu.memory_space<vmem>>, vector<1x8x8xbf16>
      %122 = vector.shape_cast %121 : vector<1x8x8xbf16> to vector<8x8xbf16>
      %123 = vector.shape_cast %120 : vector<8x8xbf16> to vector<1x8x8xbf16>
      tpu.vector_store %arg13[%c0_73, %c0_74, %c0_75], %123 {strides = array<i32>} : memref<4x8x8xbf16, #tpu.memory_space<vmem>>, vector<1x8x8xbf16>,
      %124 = vector.extract_strided_slice %109 {offsets = [0, 8], sizes = [8, 8], strides = [1, 1]} : vector<8x32xbf16> to vector<8x8xbf16>
      %c1_76 = arith.constant 1 : index
      %c0_77 = arith.constant 0 : index
      %c0_78 = arith.constant 0 : index
      %125 = vector.load %arg12[%c1_76, %c0_77, %c0_78] : memref<4x8x8xbf16, #tpu.memory_space<vmem>>, vector<1x8x8xbf16>
      %126 = vector.shape_cast %125 : vector<1x8x8xbf16> to vector<8x8xbf16>
      %127 = vector.shape_cast %124 : vector<8x8xbf16> to vector<1x8x8xbf16>
      tpu.vector_store %arg12[%c1_76, %c0_77, %c0_78], %127 {strides = array<i32>} : memref<4x8x8xbf16, #tpu.memory_space<vmem>>, vector<1x8x8xbf16>,
      %128 = vector.extract_strided_slice %115 {offsets = [0, 8], sizes = [8, 8], strides = [1, 1]} : vector<8x32xbf16> to vector<8x8xbf16>
      %c1_79 = arith.constant 1 : index
      %c0_80 = arith.constant 0 : index
      %c0_81 = arith.constant 0 : index
      %129 = vector.load %arg13[%c1_79, %c0_80, %c0_81] : memref<4x8x8xbf16, #tpu.memory_space<vmem>>, vector<1x8x8xbf16>
      %130 = vector.shape_cast %129 : vector<1x8x8xbf16> to vector<8x8xbf16>
      %131 = vector.shape_cast %128 : vector<8x8xbf16> to vector<1x8x8xbf16>
      tpu.vector_store %arg13[%c1_79, %c0_80, %c0_81], %131 {strides = array<i32>} : memref<4x8x8xbf16, #tpu.memory_space<vmem>>, vector<1x8x8xbf16>,
      %132 = vector.extract_strided_slice %109 {offsets = [0, 16], sizes = [8, 8], strides = [1, 1]} : vector<8x32xbf16> to vector<8x8xbf16>
      %c2_82 = arith.constant 2 : index
      %c0_83 = arith.constant 0 : index
      %c0_84 = arith.constant 0 : index
      %133 = vector.load %arg12[%c2_82, %c0_83, %c0_84] : memref<4x8x8xbf16, #tpu.memory_space<vmem>>, vector<1x8x8xbf16>
      %134 = vector.shape_cast %133 : vector<1x8x8xbf16> to vector<8x8xbf16>
      %135 = vector.shape_cast %132 : vector<8x8xbf16> to vector<1x8x8xbf16>
      tpu.vector_store %arg12[%c2_82, %c0_83, %c0_84], %135 {strides = array<i32>} : memref<4x8x8xbf16, #tpu.memory_space<vmem>>, vector<1x8x8xbf16>,
      %136 = vector.extract_strided_slice %115 {offsets = [0, 16], sizes = [8, 8], strides = [1, 1]} : vector<8x32xbf16> to vector<8x8xbf16>
      %c2_85 = arith.constant 2 : index
      %c0_86 = arith.constant 0 : index
      %c0_87 = arith.constant 0 : index
      %137 = vector.load %arg13[%c2_85, %c0_86, %c0_87] : memref<4x8x8xbf16, #tpu.memory_space<vmem>>, vector<1x8x8xbf16>
      %138 = vector.shape_cast %137 : vector<1x8x8xbf16> to vector<8x8xbf16>
      %139 = vector.shape_cast %136 : vector<8x8xbf16> to vector<1x8x8xbf16>
      tpu.vector_store %arg13[%c2_85, %c0_86, %c0_87], %139 {strides = array<i32>} : memref<4x8x8xbf16, #tpu.memory_space<vmem>>, vector<1x8x8xbf16>,
      %140 = vector.extract_strided_slice %109 {offsets = [0, 24], sizes = [8, 8], strides = [1, 1]} : vector<8x32xbf16> to vector<8x8xbf16>
      %c3_88 = arith.constant 3 : index
      %c0_89 = arith.constant 0 : index
      %c0_90 = arith.constant 0 : index
      %141 = vector.load %arg12[%c3_88, %c0_89, %c0_90] : memref<4x8x8xbf16, #tpu.memory_space<vmem>>, vector<1x8x8xbf16>
      %142 = vector.shape_cast %141 : vector<1x8x8xbf16> to vector<8x8xbf16>
      %143 = vector.shape_cast %140 : vector<8x8xbf16> to vector<1x8x8xbf16>
      tpu.vector_store %arg12[%c3_88, %c0_89, %c0_90], %143 {strides = array<i32>} : memref<4x8x8xbf16, #tpu.memory_space<vmem>>, vector<1x8x8xbf16>,
      %144 = vector.extract_strided_slice %115 {offsets = [0, 24], sizes = [8, 8], strides = [1, 1]} : vector<8x32xbf16> to vector<8x8xbf16>
      %c3_91 = arith.constant 3 : index
      %c0_92 = arith.constant 0 : index
      %c0_93 = arith.constant 0 : index
      %145 = vector.load %arg13[%c3_91, %c0_92, %c0_93] : memref<4x8x8xbf16, #tpu.memory_space<vmem>>, vector<1x8x8xbf16>
      %146 = vector.shape_cast %145 : vector<1x8x8xbf16> to vector<8x8xbf16>
      %147 = vector.shape_cast %144 : vector<8x8xbf16> to vector<1x8x8xbf16>
      tpu.vector_store %arg13[%c3_91, %c0_92, %c0_93], %147 {strides = array<i32>} : memref<4x8x8xbf16, #tpu.memory_space<vmem>>, vector<1x8x8xbf16>,
    } else {
    }
    %c0 = arith.constant 0 : index
    %c0_1 = arith.constant 0 : index
    %c0_2 = arith.constant 0 : index
    %3 = vector.load %arg2[%c0, %c0_1, %c0_2] : memref<1x8x32xf32, #tpu.memory_space<vmem>>, vector<1x8x32xf32>
    %4 = vector.shape_cast %3 : vector<1x8x32xf32> to vector<8x32xf32>
    %5 = arith.truncf %4 : vector<8x32xf32> to vector<8x32xbf16>
    %c0_3 = arith.constant 0 : index
    %c0_4 = arith.constant 0 : index
    %6 = vector.load %arg5[%c0_3, %c0_4] : memref<32x32xbf16, #tpu.memory_space<vmem>>, vector<32x32xbf16>
    %cst = arith.constant dense<0.000000e+00> : vector<8x32xf32>
    %7 = tpu.matmul %5, %6, %cst {dimension_numbers = #tpu.dot_dimension_numbers<[1], [0], [0], [1], [0, 0, 1, 1], [], []>} : vector<8x32xbf16>, vector<32x32xbf16>, vector<8x32xf32> -> vector<8x32xf32>
    %c0_5 = arith.constant 0 : index
    %c0_6 = arith.constant 0 : index
    %8 = vector.load %arg6[%c0_5, %c0_6] : memref<1x32xf32, #tpu.memory_space<vmem>>, vector<1x32xf32>
    %9 = vector.broadcast %8 : vector<1x32xf32> to vector<8x32xf32>
    %10 = arith.addf %7, %9 : vector<8x32xf32>
    %cst_7 = arith.constant 0.353553385 : f32
    %11 = vector.broadcast %cst_7 : f32 to vector<8x32xf32>
    %12 = arith.mulf %10, %11 : vector<8x32xf32>
    %13 = arith.truncf %12 : vector<8x32xf32> to vector<8x32xbf16>
    %14 = vector.extract_strided_slice %13 {offsets = [0, 0], sizes = [8, 8], strides = [1, 1]} : vector<8x32xbf16> to vector<8x8xbf16>
    %c0_8 = arith.constant 0 : index
    %c0_9 = arith.constant 0 : index
    %c0_10 = arith.constant 0 : index
    %15 = vector.load %arg12[%c0_8, %c0_9, %c0_10] : memref<4x8x8xbf16, #tpu.memory_space<vmem>>, vector<1x8x8xbf16>
    %16 = vector.shape_cast %15 : vector<1x8x8xbf16> to vector<8x8xbf16>
    %c0_11 = arith.constant 0 : index
    %c0_12 = arith.constant 0 : index
    %c0_13 = arith.constant 0 : index
    %17 = vector.load %arg13[%c0_11, %c0_12, %c0_13] : memref<4x8x8xbf16, #tpu.memory_space<vmem>>, vector<1x8x8xbf16>
    %18 = vector.shape_cast %17 : vector<1x8x8xbf16> to vector<8x8xbf16>
    %cst_14 = arith.constant dense<0.000000e+00> : vector<8x8xf32>
    %19 = tpu.matmul %14, %16, %cst_14 {dimension_numbers = #tpu.dot_dimension_numbers<[1], [1], [0], [0], [0, 0, 1, 0], [], []>} : vector<8x8xbf16>, vector<8x8xbf16>, vector<8x8xf32> -> vector<8x8xf32>
    %cst_15 = arith.constant dense<0xFF800000> : vector<8xf32>
    %20 = vector.multi_reduction <maximumf>, %19, %cst_15 [1] : vector<8x8xf32> to vector<8xf32>
    %21 = vector.shape_cast %20 : vector<8xf32> to vector<8x1xf32>
    %22 = vector.broadcast %21 : vector<8x1xf32> to vector<8x8xf32>
    %23 = arith.subf %19, %22 : vector<8x8xf32>
    %24 = math.exp %23 : vector<8x8xf32>
    %cst_16 = arith.constant dense<0.000000e+00> : vector<8xf32>
    %25 = vector.multi_reduction <add>, %24, %cst_16 [1] : vector<8x8xf32> to vector<8xf32>
    %26 = vector.shape_cast %25 : vector<8xf32> to vector<8x1xf32>
    %27 = arith.truncf %24 : vector<8x8xf32> to vector<8x8xbf16>
    %cst_17 = arith.constant dense<0.000000e+00> : vector<8x8xf32>
    %28 = tpu.matmul %27, %18, %cst_17 {dimension_numbers = #tpu.dot_dimension_numbers<[1], [0], [0], [1], [0, 0, 1, 1], [], []>} : vector<8x8xbf16>, vector<8x8xbf16>, vector<8x8xf32> -> vector<8x8xf32>
    %29 = tpu.reciprocal %26 {approx = true} : vector<8x1xf32> -> vector<8x1xf32>
    %30 = vector.broadcast %29 : vector<8x1xf32> to vector<8x8xf32>
    %31 = arith.mulf %28, %30 : vector<8x8xf32>
    %c0_18 = arith.constant 0 : index
    %c0_19 = arith.constant 0 : index
    %c0_20 = arith.constant 0 : index
    %32 = vector.load %arg11[%c0_18, %c0_19, %c0_20] : memref<1x8x32xf32, #tpu.memory_space<vmem>>, vector<1x8x8xf32>
    %33 = vector.shape_cast %32 : vector<1x8x8xf32> to vector<8x8xf32>
    %34 = vector.shape_cast %31 : vector<8x8xf32> to vector<1x8x8xf32>
    tpu.vector_store %arg11[%c0_18, %c0_19, %c0_20], %34 {strides = array<i32>} : memref<1x8x32xf32, #tpu.memory_space<vmem>>, vector<1x8x8xf32>,
    %35 = vector.extract_strided_slice %13 {offsets = [0, 8], sizes = [8, 8], strides = [1, 1]} : vector<8x32xbf16> to vector<8x8xbf16>
    %c1 = arith.constant 1 : index
    %c0_21 = arith.constant 0 : index
    %c0_22 = arith.constant 0 : index
    %36 = vector.load %arg12[%c1, %c0_21, %c0_22] : memref<4x8x8xbf16, #tpu.memory_space<vmem>>, vector<1x8x8xbf16>
    %37 = vector.shape_cast %36 : vector<1x8x8xbf16> to vector<8x8xbf16>
    %c1_23 = arith.constant 1 : index
    %c0_24 = arith.constant 0 : index
    %c0_25 = arith.constant 0 : index
    %38 = vector.load %arg13[%c1_23, %c0_24, %c0_25] : memref<4x8x8xbf16, #tpu.memory_space<vmem>>, vector<1x8x8xbf16>
    %39 = vector.shape_cast %38 : vector<1x8x8xbf16> to vector<8x8xbf16>
    %cst_26 = arith.constant dense<0.000000e+00> : vector<8x8xf32>
    %40 = tpu.matmul %35, %37, %cst_26 {dimension_numbers = #tpu.dot_dimension_numbers<[1], [1], [0], [0], [0, 0, 1, 0], [], []>} : vector<8x8xbf16>, vector<8x8xbf16>, vector<8x8xf32> -> vector<8x8xf32>
    %cst_27 = arith.constant dense<0xFF800000> : vector<8xf32>
    %41 = vector.multi_reduction <maximumf>, %40, %cst_27 [1] : vector<8x8xf32> to vector<8xf32>
    %42 = vector.shape_cast %41 : vector<8xf32> to vector<8x1xf32>
    %43 = vector.broadcast %42 : vector<8x1xf32> to vector<8x8xf32>
    %44 = arith.subf %40, %43 : vector<8x8xf32>
    %45 = math.exp %44 : vector<8x8xf32>
    %cst_28 = arith.constant dense<0.000000e+00> : vector<8xf32>
    %46 = vector.multi_reduction <add>, %45, %cst_28 [1] : vector<8x8xf32> to vector<8xf32>
    %47 = vector.shape_cast %46 : vector<8xf32> to vector<8x1xf32>
    %48 = arith.truncf %45 : vector<8x8xf32> to vector<8x8xbf16>
    %cst_29 = arith.constant dense<0.000000e+00> : vector<8x8xf32>
    %49 = tpu.matmul %48, %39, %cst_29 {dimension_numbers = #tpu.dot_dimension_numbers<[1], [0], [0], [1], [0, 0, 1, 1], [], []>} : vector<8x8xbf16>, vector<8x8xbf16>, vector<8x8xf32> -> vector<8x8xf32>
    %50 = tpu.reciprocal %47 {approx = true} : vector<8x1xf32> -> vector<8x1xf32>
    %51 = vector.broadcast %50 : vector<8x1xf32> to vector<8x8xf32>
    %52 = arith.mulf %49, %51 : vector<8x8xf32>
    %c0_30 = arith.constant 0 : index
    %c0_31 = arith.constant 0 : index
    %c8 = arith.constant 8 : index
    %53 = vector.load %arg11[%c0_30, %c0_31, %c8] : memref<1x8x32xf32, #tpu.memory_space<vmem>>, vector<1x8x8xf32>
    %54 = vector.shape_cast %53 : vector<1x8x8xf32> to vector<8x8xf32>
    %55 = vector.shape_cast %52 : vector<8x8xf32> to vector<1x8x8xf32>
    tpu.vector_store %arg11[%c0_30, %c0_31, %c8], %55 {strides = array<i32>} : memref<1x8x32xf32, #tpu.memory_space<vmem>>, vector<1x8x8xf32>,
    %56 = vector.extract_strided_slice %13 {offsets = [0, 16], sizes = [8, 8], strides = [1, 1]} : vector<8x32xbf16> to vector<8x8xbf16>
    %c2 = arith.constant 2 : index
    %c0_32 = arith.constant 0 : index
    %c0_33 = arith.constant 0 : index
    %57 = vector.load %arg12[%c2, %c0_32, %c0_33] : memref<4x8x8xbf16, #tpu.memory_space<vmem>>, vector<1x8x8xbf16>
    %58 = vector.shape_cast %57 : vector<1x8x8xbf16> to vector<8x8xbf16>
    %c2_34 = arith.constant 2 : index
    %c0_35 = arith.constant 0 : index
    %c0_36 = arith.constant 0 : index
    %59 = vector.load %arg13[%c2_34, %c0_35, %c0_36] : memref<4x8x8xbf16, #tpu.memory_space<vmem>>, vector<1x8x8xbf16>
    %60 = vector.shape_cast %59 : vector<1x8x8xbf16> to vector<8x8xbf16>
    %cst_37 = arith.constant dense<0.000000e+00> : vector<8x8xf32>
    %61 = tpu.matmul %56, %58, %cst_37 {dimension_numbers = #tpu.dot_dimension_numbers<[1], [1], [0], [0], [0, 0, 1, 0], [], []>} : vector<8x8xbf16>, vector<8x8xbf16>, vector<8x8xf32> -> vector<8x8xf32>
    %cst_38 = arith.constant dense<0xFF800000> : vector<8xf32>
    %62 = vector.multi_reduction <maximumf>, %61, %cst_38 [1] : vector<8x8xf32> to vector<8xf32>
    %63 = vector.shape_cast %62 : vector<8xf32> to vector<8x1xf32>
    %64 = vector.broadcast %63 : vector<8x1xf32> to vector<8x8xf32>
    %65 = arith.subf %61, %64 : vector<8x8xf32>
    %66 = math.exp %65 : vector<8x8xf32>
    %cst_39 = arith.constant dense<0.000000e+00> : vector<8xf32>
    %67 = vector.multi_reduction <add>, %66, %cst_39 [1] : vector<8x8xf32> to vector<8xf32>
    %68 = vector.shape_cast %67 : vector<8xf32> to vector<8x1xf32>
    %69 = arith.truncf %66 : vector<8x8xf32> to vector<8x8xbf16>
    %cst_40 = arith.constant dense<0.000000e+00> : vector<8x8xf32>
    %70 = tpu.matmul %69, %60, %cst_40 {dimension_numbers = #tpu.dot_dimension_numbers<[1], [0], [0], [1], [0, 0, 1, 1], [], []>} : vector<8x8xbf16>, vector<8x8xbf16>, vector<8x8xf32> -> vector<8x8xf32>
    %71 = tpu.reciprocal %68 {approx = true} : vector<8x1xf32> -> vector<8x1xf32>
    %72 = vector.broadcast %71 : vector<8x1xf32> to vector<8x8xf32>
    %73 = arith.mulf %70, %72 : vector<8x8xf32>
    %c0_41 = arith.constant 0 : index
    %c0_42 = arith.constant 0 : index
    %c16 = arith.constant 16 : index
    %74 = vector.load %arg11[%c0_41, %c0_42, %c16] : memref<1x8x32xf32, #tpu.memory_space<vmem>>, vector<1x8x8xf32>
    %75 = vector.shape_cast %74 : vector<1x8x8xf32> to vector<8x8xf32>
    %76 = vector.shape_cast %73 : vector<8x8xf32> to vector<1x8x8xf32>
    tpu.vector_store %arg11[%c0_41, %c0_42, %c16], %76 {strides = array<i32>} : memref<1x8x32xf32, #tpu.memory_space<vmem>>, vector<1x8x8xf32>,
    %77 = vector.extract_strided_slice %13 {offsets = [0, 24], sizes = [8, 8], strides = [1, 1]} : vector<8x32xbf16> to vector<8x8xbf16>
    %c3 = arith.constant 3 : index
    %c0_43 = arith.constant 0 : index
    %c0_44 = arith.constant 0 : index
    %78 = vector.load %arg12[%c3, %c0_43, %c0_44] : memref<4x8x8xbf16, #tpu.memory_space<vmem>>, vector<1x8x8xbf16>
    %79 = vector.shape_cast %78 : vector<1x8x8xbf16> to vector<8x8xbf16>
    %c3_45 = arith.constant 3 : index
    %c0_46 = arith.constant 0 : index
    %c0_47 = arith.constant 0 : index
    %80 = vector.load %arg13[%c3_45, %c0_46, %c0_47] : memref<4x8x8xbf16, #tpu.memory_space<vmem>>, vector<1x8x8xbf16>
    %81 = vector.shape_cast %80 : vector<1x8x8xbf16> to vector<8x8xbf16>
    %cst_48 = arith.constant dense<0.000000e+00> : vector<8x8xf32>
    %82 = tpu.matmul %77, %79, %cst_48 {dimension_numbers = #tpu.dot_dimension_numbers<[1], [1], [0], [0], [0, 0, 1, 0], [], []>} : vector<8x8xbf16>, vector<8x8xbf16>, vector<8x8xf32> -> vector<8x8xf32>
    %cst_49 = arith.constant dense<0xFF800000> : vector<8xf32>
    %83 = vector.multi_reduction <maximumf>, %82, %cst_49 [1] : vector<8x8xf32> to vector<8xf32>
    %84 = vector.shape_cast %83 : vector<8xf32> to vector<8x1xf32>
    %85 = vector.broadcast %84 : vector<8x1xf32> to vector<8x8xf32>
    %86 = arith.subf %82, %85 : vector<8x8xf32>
    %87 = math.exp %86 : vector<8x8xf32>
    %cst_50 = arith.constant dense<0.000000e+00> : vector<8xf32>
    %88 = vector.multi_reduction <add>, %87, %cst_50 [1] : vector<8x8xf32> to vector<8xf32>
    %89 = vector.shape_cast %88 : vector<8xf32> to vector<8x1xf32>
    %90 = arith.truncf %87 : vector<8x8xf32> to vector<8x8xbf16>
    %cst_51 = arith.constant dense<0.000000e+00> : vector<8x8xf32>
    %91 = tpu.matmul %90, %81, %cst_51 {dimension_numbers = #tpu.dot_dimension_numbers<[1], [0], [0], [1], [0, 0, 1, 1], [], []>} : vector<8x8xbf16>, vector<8x8xbf16>, vector<8x8xf32> -> vector<8x8xf32>
    %92 = tpu.reciprocal %89 {approx = true} : vector<8x1xf32> -> vector<8x1xf32>
    %93 = vector.broadcast %92 : vector<8x1xf32> to vector<8x8xf32>
    %94 = arith.mulf %91, %93 : vector<8x8xf32>
    %c0_52 = arith.constant 0 : index
    %c0_53 = arith.constant 0 : index
    %c24 = arith.constant 24 : index
    %95 = vector.load %arg11[%c0_52, %c0_53, %c24] : memref<1x8x32xf32, #tpu.memory_space<vmem>>, vector<1x8x8xf32>
    %96 = vector.shape_cast %95 : vector<1x8x8xf32> to vector<8x8xf32>
    %97 = vector.shape_cast %94 : vector<8x8xf32> to vector<1x8x8xf32>
    tpu.vector_store %arg11[%c0_52, %c0_53, %c24], %97 {strides = array<i32>} : memref<1x8x32xf32, #tpu.memory_space<vmem>>, vector<1x8x8xf32>,
    return
  }
  func.func @transform_0(%arg0: i32, %arg1: i32) -> (i32, i32, i32) {
    %c0_i32 = arith.constant 0 : i32
    %c0_i32_0 = arith.constant 0 : i32
    return %arg0, %arg1, %c0_i32 : i32, i32, i32
  }
  func.func @transform_1(%arg0: i32, %arg1: i32) -> (i32, i32, i32) {
    %c0_i32 = arith.constant 0 : i32
    %c0_i32_0 = arith.constant 0 : i32
    %c0_i32_1 = arith.constant 0 : i32
    return %arg0, %c0_i32, %c0_i32_0 : i32, i32, i32
  }
  func.func @transform_2(%arg0: i32, %arg1: i32) -> (i32, i32, i32) {
    %c0_i32 = arith.constant 0 : i32
    %c0_i32_0 = arith.constant 0 : i32
    %c0_i32_1 = arith.constant 0 : i32
    return %arg0, %c0_i32, %c0_i32_0 : i32, i32, i32
  }
  func.func @transform_3(%arg0: i32, %arg1: i32) -> (i32, i32) {
    %c0_i32 = arith.constant 0 : i32
    %c0_i32_0 = arith.constant 0 : i32
    %c0_i32_1 = arith.constant 0 : i32
    return %c0_i32, %c0_i32_0 : i32, i32
  }
  func.func @transform_4(%arg0: i32, %arg1: i32) -> (i32, i32) {
    %c0_i32 = arith.constant 0 : i32
    %c0_i32_0 = arith.constant 0 : i32
    %c0_i32_1 = arith.constant 0 : i32
    return %c0_i32, %c0_i32_0 : i32, i32
  }
  func.func @transform_5(%arg0: i32, %arg1: i32) -> (i32, i32) {
    %c0_i32 = arith.constant 0 : i32
    %c0_i32_0 = arith.constant 0 : i32
    %c0_i32_1 = arith.constant 0 : i32
    return %c0_i32, %c0_i32_0 : i32, i32
  }
  func.func @transform_6(%arg0: i32, %arg1: i32) -> (i32, i32) {
    %c0_i32 = arith.constant 0 : i32
    %c0_i32_0 = arith.constant 0 : i32
    %c0_i32_1 = arith.constant 0 : i32
    return %c0_i32, %c0_i32_0 : i32, i32
  }
  func.func @transform_7(%arg0: i32, %arg1: i32) -> (i32, i32) {
    %c0_i32 = arith.constant 0 : i32
    %c0_i32_0 = arith.constant 0 : i32
    %c0_i32_1 = arith.constant 0 : i32
    return %c0_i32, %c0_i32_0 : i32, i32
  }
  func.func @transform_8(%arg0: i32, %arg1: i32) -> (i32, i32) {
    %c0_i32 = arith.constant 0 : i32
    %c0_i32_0 = arith.constant 0 : i32
    %c0_i32_1 = arith.constant 0 : i32
    return %c0_i32, %c0_i32_0 : i32, i32
  }
  func.func @transform_9(%arg0: i32, %arg1: i32) -> (i32, i32, i32) {
    %c0_i32 = arith.constant 0 : i32
    %c0_i32_0 = arith.constant 0 : i32
    return %arg0, %arg1, %c0_i32 : i32, i32, i32
  }
}

</mosaic_0001>

<llo_original>
// kernel: tpu_custom_call.1
$region0: #{tpu_custom_call.1}
  #allocation0 [shape = 'u32[]', space=smem, size = 0x4, offset = 0x4, fixed_abs, tag = 'smem constant byte address 0x4 - core index']
  #allocation1 [shape = 'u32[144,128]{1,0:T(1,128)}', space=vmem, size = 0x12000, scoped, tag = 'internal scratch']
  #allocation2 [shape = 'bf16[4,8,8]{2,1,0:T(8,128)(2,1)}', space=vmem, size = 0x2000, scoped, tag = 'scratch operand']
  #allocation3 [shape = 'bf16[4,8,8]{2,1,0:T(8,128)(2,1)}', space=vmem, size = 0x2000, scoped, tag = 'scratch operand']
  %s0 = inlined_call_operand.hbm [shape: f32[2,8,32], index: 0, kind: input, shape index: {}]
  %s1 = inlined_call_operand.hbm [shape: f32[2,8,32], index: 1, kind: input, shape index: {}]
  %s2 = inlined_call_operand.hbm [shape: f32[2,8,32], index: 2, kind: input, shape index: {}]
  %s3 = inlined_call_operand.hbm [shape: bf16[32,32], index: 3, kind: input, shape index: {}]
  %s4 = inlined_call_operand.vmem [shape: f32[1,32], index: 4, kind: input, shape index: {}]
  %s5 = inlined_call_operand.hbm [shape: bf16[32,32], index: 5, kind: input, shape index: {}]
  %s6 = inlined_call_operand.vmem [shape: f32[1,32], index: 6, kind: input, shape index: {}]
  %s7 = inlined_call_operand.hbm [shape: bf16[32,32], index: 7, kind: input, shape index: {}]
  %s8 = inlined_call_operand.vmem [shape: f32[1,32], index: 8, kind: input, shape index: {}]
  %s9 = inlined_call_operand.hbm [shape: f32[2,8,32], index: 9, kind: output, shape index: {}]
  %s10 = sld [smem:[#allocation0]]
  $region97: #{tpu_custom_call.1} parent=0
    _
  %s12 = ssub.s32 1, %s10
  %s13 = scalar_select 0, %s12, %s10
  $region1: #{tpu_custom_call.1} parent=0
    #allocation4 [shape = 'u8[8192]{0}', space=vmem, size = 0x2000, scoped, tag = 'input window, operand 0']
    #allocation5 [shape = 's32[2]{0}', space=sflag, size = 0x8, scoped, tag = 'scoped memory for tpu_custom_call.1']
    #allocation6 [shape = 's32[2]{0}', space=sflag, size = 0x8, scoped, tag = 'scoped memory for tpu_custom_call.1']
    #allocation7 [shape = 'u8[4096]{0}', space=vmem, size = 0x1000, scoped, tag = 'input window, operand 1, single buffered']
    #allocation8 [shape = 's32[1]{0}', space=sflag, size = 0x4, scoped, tag = 'scoped memory for tpu_custom_call.1']
    #allocation9 [shape = 'u8[4096]{0}', space=vmem, size = 0x1000, scoped, tag = 'input window, operand 2, single buffered']
    #allocation10 [shape = 'u8[8192]{0}', space=vmem, size = 0x2000, scoped, tag = 'input window, operand 3, single buffered']
    #allocation11 [shape = 's32[1]{0}', space=sflag, size = 0x4, scoped, tag = 'scoped memory for tpu_custom_call.1']
    #allocation12 [shape = 'u8[8192]{0}', space=vmem, size = 0x2000, scoped, tag = 'input window, operand 5, single buffered']
    #allocation13 [shape = 'u8[8192]{0}', space=vmem, size = 0x2000, scoped, tag = 'input window, operand 7, single buffered']
    #allocation14 [shape = 's32[1]{0}', space=sflag, size = 0x4, scoped, tag = 'scoped memory for tpu_custom_call.1']
    #allocation15 [shape = 'u8[8192]{0}', space=vmem, size = 0x2000, scoped, tag = 'output window, operand 0']
    %14 = vsyncpa [#allocation5], 0
    %s15 = scalar_lea.sflag [#allocation5], 1
    %16 = vsyncpa %s15, 0
    %17 = vsyncpa [#allocation8], 0
    %18 = vsyncpa [#allocation11], 0
    %19 = vsyncpa [#allocation14], 0
    %20 = vsyncpa [#allocation6], 0
    %s21 = scalar_lea.sflag [#allocation6], 1
    %22 = vsyncpa %s21, 0
    loop: start=0, step=1, limit=4
    $region2: #{tpu_custom_call.1} parent=1 // loop_pre_header
      _
    $region3: #{tpu_custom_call.1} parent=1 // loop_header
      %s24 = sphi 0, %s28
      %p25 = scmp.ge.s32.totalorder %s24, 4
      %s31 = sphi 0, %s43
      %s32 = sphi 0, %s39
      %s33 = sphi 0, %s31
      %s34 = sphi 0, %s32
      %s35 = sphi 0, %s33
      %s36 = sphi 0, %s34
      %s48 = sphi 0, %s50
      %s51 = sphi 0, %s48
      %s52 = sphi 0, %s51
      %s68 = sphi 0, %s52
      %s74 = sphi 0, %s76
      %s77 = sphi 0, %s74
      %s78 = sphi 0, %s77
      %s94 = sphi 0, %s78
      %s100 = sphi 0, %s102
      %s103 = sphi 0, %s100
      %s104 = sphi 0, %s103
      %s120 = sphi 0, %s104
      %s124 = sphi 0, %s124
      %s126 = sphi 0, %s124
      %s127 = sphi 0, %s126
      %s141 = sphi 0, %s127
      %s145 = sphi 0, %s145
      %s147 = sphi 0, %s145
      %s148 = sphi 0, %s147
      %s162 = sphi 0, %s148
      %s166 = sphi 0, %s166
      %s168 = sphi 0, %s166
      %s169 = sphi 0, %s168
      %s183 = sphi 0, %s169
      %s187 = sphi 0, %s187
      %s189 = sphi 0, %s187
      %s190 = sphi 0, %s189
      %s204 = sphi 0, %s190
      %s208 = sphi 0, %s208
      %s210 = sphi 0, %s208
      %s211 = sphi 0, %s210
      %s225 = sphi 0, %s211
      %s229 = sphi 0, %s229
      %s231 = sphi 0, %s229
      %s232 = sphi 0, %s231
      %s246 = sphi 0, %s232
      %s254 = sphi 0, %s256
      %s257 = sphi 0, %s254
      %s258 = sphi 0, %s257
      %s274 = sphi 0, %s258
    $region4: #{tpu_custom_call.1} parent=1 // loop_header_branch
      %27 = sbr.rel (%p25) target = $region8
    $region5: #{tpu_custom_call.1} parent=1 // loop_body
      %s29 = ssub.s32 %s24, 1
      %s30 = ssub.s32 %s24, 2
      %s37 = sadd.s32 1, %s32
      %p38 = scmp.ge.s32.totalorder %s37, 1
      %s39 = scalar_select %p38, 0, %s37
      %s40 = sadd.s32 1, %s31
      %s41 = scalar_select %p38, %s40, %s31
      %p42 = scmp.ge.s32.totalorder %s41, 2
      %s43 = scalar_select %p42, 0, %s41
      %s44 = ssub.s32 %s31, %s43
      %s45 = ssub.s32 %s32, %s39
      %s46 = sor.u32 %s44, %s45
      %p47 = scmp.eq.s32.totalorder %s46, 0
      %s49 = sadd.s32 %s48, 1
      %s50 = scalar_select %p47, %s48, %s49
      %p53 = pneg %p47
      %p54 = scmp.eq.s32.totalorder %s24, 1
      %p55 = por %p53, %p54
      %p56 = scmp.ne.s32.totalorder %s48, %s51
      %p57 = scmp.eq.s32.totalorder %s24, 0
      %p58 = por %p56, %p57
      %p59 = scmp.ne.s32.totalorder %s48, %s51
      %p60 = scmp.eq.s32.totalorder %s29, 1
      %p61 = por %p59, %p60
      %p62 = scmp.ne.s32.totalorder %s51, %s52
      %p63 = scmp.eq.s32.totalorder %s29, 0
      %p64 = por %p62, %p63
      %p65 = scmp.ne.s32.totalorder %s51, %s52
      %p66 = scmp.eq.s32.totalorder %s30, 1
      %p67 = por %p65, %p66
      %p69 = scmp.ne.s32.totalorder %s52, %s68
      %p70 = scmp.eq.s32.totalorder %s30, 0
      %p71 = por %p69, %p70
      %s72 = ssub.s32 %s31, %s43
      %p73 = scmp.eq.s32.totalorder %s72, 0
      %s75 = sadd.s32 %s74, 1
      %s76 = scalar_select %p73, %s74, %s75
      %p79 = pneg %p73
      %p80 = scmp.eq.s32.totalorder %s24, 1
      %p81 = por %p79, %p80
      %p82 = scmp.ne.s32.totalorder %s74, %s77
      %p83 = scmp.eq.s32.totalorder %s24, 0
      %p84 = por %p82, %p83
      %p85 = scmp.ne.s32.totalorder %s74, %s77
      %p86 = scmp.eq.s32.totalorder %s29, 1
      %p87 = por %p85, %p86
      %p88 = scmp.ne.s32.totalorder %s77, %s78
      %p89 = scmp.eq.s32.totalorder %s29, 0
      %p90 = por %p88, %p89
      %p91 = scmp.ne.s32.totalorder %s77, %s78
      %p92 = scmp.eq.s32.totalorder %s30, 1
      %p93 = por %p91, %p92
      %p95 = scmp.ne.s32.totalorder %s78, %s94
      %p96 = scmp.eq.s32.totalorder %s30, 0
      %p97 = por %p95, %p96
      %s98 = ssub.s32 %s31, %s43
      %p99 = scmp.eq.s32.totalorder %s98, 0
      %s101 = sadd.s32 %s100, 1
      %s102 = scalar_select %p99, %s100, %s101
      %p105 = pneg %p99
      %p106 = scmp.eq.s32.totalorder %s24, 1
      %p107 = por %p105, %p106
      %p108 = scmp.ne.s32.totalorder %s100, %s103
      %p109 = scmp.eq.s32.totalorder %s24, 0
      %p110 = por %p108, %p109
      %p111 = scmp.ne.s32.totalorder %s100, %s103
      %p112 = scmp.eq.s32.totalorder %s29, 1
      %p113 = por %p111, %p112
      %p114 = scmp.ne.s32.totalorder %s103, %s104
      %p115 = scmp.eq.s32.totalorder %s29, 0
      %p116 = por %p114, %p115
      %p117 = scmp.ne.s32.totalorder %s103, %s104
      %p118 = scmp.eq.s32.totalorder %s30, 1
      %p119 = por %p117, %p118
      %p121 = scmp.ne.s32.totalorder %s104, %s120
      %p122 = scmp.eq.s32.totalorder %s30, 0
      %p123 = por %p121, %p122
      %s125 = sadd.s32 %s124, 1
      %p128 = scmp.eq.s32.totalorder %s24, 1
      %p129 = scmp.ne.s32.totalorder %s124, %s126
      %p130 = scmp.eq.s32.totalorder %s24, 0
      %p131 = por %p129, %p130
      %p132 = scmp.ne.s32.totalorder %s124, %s126
      %p133 = scmp.eq.s32.totalorder %s29, 1
      %p134 = por %p132, %p133
      %p135 = scmp.ne.s32.totalorder %s126, %s127
      %p136 = scmp.eq.s32.totalorder %s29, 0
      %p137 = por %p135, %p136
      %p138 = scmp.ne.s32.totalorder %s126, %s127
      %p139 = scmp.eq.s32.totalorder %s30, 1
      %p140 = por %p138, %p139
      %p142 = scmp.ne.s32.totalorder %s127, %s141
      %p143 = scmp.eq.s32.totalorder %s30, 0
      %p144 = por %p142, %p143
      %s146 = sadd.s32 %s145, 1
      %p149 = scmp.eq.s32.totalorder %s24, 1
      %p150 = scmp.ne.s32.totalorder %s145, %s147
      %p151 = scmp.eq.s32.totalorder %s24, 0
      %p152 = por %p150, %p151
      %p153 = scmp.ne.s32.totalorder %s145, %s147
      %p154 = scmp.eq.s32.totalorder %s29, 1
      %p155 = por %p153, %p154
      %p156 = scmp.ne.s32.totalorder %s147, %s148
      %p157 = scmp.eq.s32.totalorder %s29, 0
      %p158 = por %p156, %p157
      %p159 = scmp.ne.s32.totalorder %s147, %s148
      %p160 = scmp.eq.s32.totalorder %s30, 1
      %p161 = por %p159, %p160
      %p163 = scmp.ne.s32.totalorder %s148, %s162
      %p164 = scmp.eq.s32.totalorder %s30, 0
      %p165 = por %p163, %p164
      %s167 = sadd.s32 %s166, 1
      %p170 = scmp.eq.s32.totalorder %s24, 1
      %p171 = scmp.ne.s32.totalorder %s166, %s168
      %p172 = scmp.eq.s32.totalorder %s24, 0
      %p173 = por %p171, %p172
      %p174 = scmp.ne.s32.totalorder %s166, %s168
      %p175 = scmp.eq.s32.totalorder %s29, 1
      %p176 = por %p174, %p175
      %p177 = scmp.ne.s32.totalorder %s168, %s169
      %p178 = scmp.eq.s32.totalorder %s29, 0
      %p179 = por %p177, %p178
      %p180 = scmp.ne.s32.totalorder %s168, %s169
      %p181 = scmp.eq.s32.totalorder %s30, 1
      %p182 = por %p180, %p181
      %p184 = scmp.ne.s32.totalorder %s169, %s183
      %p185 = scmp.eq.s32.totalorder %s30, 0
      %p186 = por %p184, %p185
      %s188 = sadd.s32 %s187, 1
      %p191 = scmp.eq.s32.totalorder %s24, 1
      %p192 = scmp.ne.s32.totalorder %s187, %s189
      %p193 = scmp.eq.s32.totalorder %s24, 0
      %p194 = por %p192, %p193
      %p195 = scmp.ne.s32.totalorder %s187, %s189
      %p196 = scmp.eq.s32.totalorder %s29, 1
      %p197 = por %p195, %p196
      %p198 = scmp.ne.s32.totalorder %s189, %s190
      %p199 = scmp.eq.s32.totalorder %s29, 0
      %p200 = por %p198, %p199
      %p201 = scmp.ne.s32.totalorder %s189, %s190
      %p202 = scmp.eq.s32.totalorder %s30, 1
      %p203 = por %p201, %p202
      %p205 = scmp.ne.s32.totalorder %s190, %s204
      %p206 = scmp.eq.s32.totalorder %s30, 0
      %p207 = por %p205, %p206
      %s209 = sadd.s32 %s208, 1
      %p212 = scmp.eq.s32.totalorder %s24, 1
      %p213 = scmp.ne.s32.totalorder %s208, %s210
      %p214 = scmp.eq.s32.totalorder %s24, 0
      %p215 = por %p213, %p214
      %p216 = scmp.ne.s32.totalorder %s208, %s210
      %p217 = scmp.eq.s32.totalorder %s29, 1
      %p218 = por %p216, %p217
      %p219 = scmp.ne.s32.totalorder %s210, %s211
      %p220 = scmp.eq.s32.totalorder %s29, 0
      %p221 = por %p219, %p220
      %p222 = scmp.ne.s32.totalorder %s210, %s211
      %p223 = scmp.eq.s32.totalorder %s30, 1
      %p224 = por %p222, %p223
      %p226 = scmp.ne.s32.totalorder %s211, %s225
      %p227 = scmp.eq.s32.totalorder %s30, 0
      %p228 = por %p226, %p227
      %s230 = sadd.s32 %s229, 1
      %p233 = scmp.eq.s32.totalorder %s24, 1
      %p234 = scmp.ne.s32.totalorder %s229, %s231
      %p235 = scmp.eq.s32.totalorder %s24, 0
      %p236 = por %p234, %p235
      %p237 = scmp.ne.s32.totalorder %s229, %s231
      %p238 = scmp.eq.s32.totalorder %s29, 1
      %p239 = por %p237, %p238
      %p240 = scmp.ne.s32.totalorder %s231, %s232
      %p241 = scmp.eq.s32.totalorder %s29, 0
      %p242 = por %p240, %p241
      %p243 = scmp.ne.s32.totalorder %s231, %s232
      %p244 = scmp.eq.s32.totalorder %s30, 1
      %p245 = por %p243, %p244
      %p247 = scmp.ne.s32.totalorder %s232, %s246
      %p248 = scmp.eq.s32.totalorder %s30, 0
      %p249 = por %p247, %p248
      %s250 = ssub.s32 %s31, %s43
      %s251 = ssub.s32 %s32, %s39
      %s252 = sor.u32 %s250, %s251
      %p253 = scmp.eq.s32.totalorder %s252, 0
      %s255 = sadd.s32 %s254, 1
      %s256 = scalar_select %p253, %s254, %s255
      %p259 = pneg %p253
      %p260 = scmp.eq.s32.totalorder %s24, 1
      %p261 = por %p259, %p260
      %p262 = scmp.ne.s32.totalorder %s254, %s257
      %p263 = scmp.eq.s32.totalorder %s24, 0
      %p264 = por %p262, %p263
      %p265 = scmp.ne.s32.totalorder %s254, %s257
      %p266 = scmp.eq.s32.totalorder %s29, 1
      %p267 = por %p265, %p266
      %p268 = scmp.ne.s32.totalorder %s257, %s258
      %p269 = scmp.eq.s32.totalorder %s29, 0
      %p270 = por %p268, %p269
      %p271 = scmp.ne.s32.totalorder %s257, %s258
      %p272 = scmp.eq.s32.totalorder %s30, 1
      %p273 = por %p271, %p272
      %p275 = scmp.ne.s32.totalorder %s258, %s274
      %p276 = scmp.eq.s32.totalorder %s30, 0
      %p277 = por %p275, %p276
      %p278 = scmp.le.s32.totalorder 1, %s24
      %p279 = scmp.lt.s32.totalorder %s24, 3
      %p280 = pnand %p278, %p279
      %p281 = pneg %p280
      // Predicated region
      $region9: #{tpu_custom_call.1} parent=5 // pred_check
        _
      $region10: #{tpu_custom_call.1} parent=5 // pred_check_branch
        %283 = sbr.rel (%p280) target = $region12
      $region11: #{tpu_custom_call.1} parent=5 // pred_region
        %s284 = ssub.s32 %s24, 1
        // Predicated region
        $region13: #{tpu_custom_call.1} parent=11 // pred_check
          %p285 = pneg %p90
        $region14: #{tpu_custom_call.1} parent=11 // pred_check_branch
          %287 = sbr.rel (%p285) target = $region16
        $region15: #{tpu_custom_call.1} parent=11 // pred_region
          %s289 = ssub.s32 128, 128
          %290 = vsyncadd [#allocation8], %s289
          %s291 = smul.addr %s33, 128
          %s292 = scalar_lea.hbm %s1, %s291
          %s294 = sshll.u32 [#allocation7], 4
          %s295 = int_to_ptr.vmem [resolvable:$true] %s294
          %297 = dma.hbm_to_vmem [thread:$0]  %s292, 128, %s295, [#allocation8]
        $region16: #{tpu_custom_call.1} parent=11 // pred_fallthru
          _
        // Predicated region
        $region17: #{tpu_custom_call.1} parent=11 // pred_check
          %p298 = pneg %p116
        $region18: #{tpu_custom_call.1} parent=11 // pred_check_branch
          %300 = sbr.rel (%p298) target = $region20
        $region19: #{tpu_custom_call.1} parent=11 // pred_region
          %s302 = ssub.s32 128, 128
          %303 = vsyncadd [#allocation8], %s302
          %s304 = smul.addr %s33, 128
          %s305 = scalar_lea.hbm %s2, %s304
          %s307 = sshll.u32 [#allocation9], 4
          %s308 = int_to_ptr.vmem [resolvable:$true] %s307
          %310 = dma.hbm_to_vmem [thread:$0]  %s305, 128, %s308, [#allocation8]
        $region20: #{tpu_custom_call.1} parent=11 // pred_fallthru
          _
        // Predicated region
        $region21: #{tpu_custom_call.1} parent=11 // pred_check
          %p311 = pneg %p137
        $region22: #{tpu_custom_call.1} parent=11 // pred_check_branch
          %313 = sbr.rel (%p311) target = $region24
        $region23: #{tpu_custom_call.1} parent=11 // pred_region
          %s315 = ssub.s32 256, 256
          %316 = vsyncadd [#allocation11], %s315
          %s317 = sshll.u32 [#allocation10], 4
          %s318 = int_to_ptr.vmem [resolvable:$true] %s317
          %323 = dma.hbm_to_vmem [thread:$0]  %s3, 256, %s318, [#allocation11], 64, 64, 4
        $region24: #{tpu_custom_call.1} parent=11 // pred_fallthru
          _
        // Predicated region
        $region25: #{tpu_custom_call.1} parent=11 // pred_check
          %p324 = pneg %p158
        $region26: #{tpu_custom_call.1} parent=11 // pred_check_branch
          %326 = sbr.rel (%p324) target = $region28
        $region27: #{tpu_custom_call.1} parent=11 // pred_region
          _
        $region28: #{tpu_custom_call.1} parent=11 // pred_fallthru
          _
        // Predicated region
        $region29: #{tpu_custom_call.1} parent=11 // pred_check
          %p327 = pneg %p179
        $region30: #{tpu_custom_call.1} parent=11 // pred_check_branch
          %329 = sbr.rel (%p327) target = $region32
        $region31: #{tpu_custom_call.1} parent=11 // pred_region
          %s331 = ssub.s32 256, 256
          %332 = vsyncadd [#allocation11], %s331
          %s333 = sshll.u32 [#allocation12], 4
          %s334 = int_to_ptr.vmem [resolvable:$true] %s333
          %339 = dma.hbm_to_vmem [thread:$0]  %s5, 256, %s334, [#allocation11], 64, 64, 4
        $region32: #{tpu_custom_call.1} parent=11 // pred_fallthru
          _
        // Predicated region
        $region33: #{tpu_custom_call.1} parent=11 // pred_check
          %p340 = pneg %p200
        $region34: #{tpu_custom_call.1} parent=11 // pred_check_branch
          %342 = sbr.rel (%p340) target = $region36
        $region35: #{tpu_custom_call.1} parent=11 // pred_region
          _
        $region36: #{tpu_custom_call.1} parent=11 // pred_fallthru
          _
        // Predicated region
        $region37: #{tpu_custom_call.1} parent=11 // pred_check
          %p343 = pneg %p221
        $region38: #{tpu_custom_call.1} parent=11 // pred_check_branch
          %345 = sbr.rel (%p343) target = $region40
        $region39: #{tpu_custom_call.1} parent=11 // pred_region
          %s347 = ssub.s32 256, 256
          %348 = vsyncadd [#allocation14], %s347
          %s349 = sshll.u32 [#allocation13], 4
          %s350 = int_to_ptr.vmem [resolvable:$true] %s349
          %355 = dma.hbm_to_vmem [thread:$0]  %s7, 256, %s350, [#allocation14], 64, 64, 4
        $region40: #{tpu_custom_call.1} parent=11 // pred_fallthru
          _
        // Predicated region
        $region41: #{tpu_custom_call.1} parent=11 // pred_check
          %p356 = pneg %p242
        $region42: #{tpu_custom_call.1} parent=11 // pred_check_branch
          %358 = sbr.rel (%p356) target = $region44
        $region43: #{tpu_custom_call.1} parent=11 // pred_region
          _
        $region44: #{tpu_custom_call.1} parent=11 // pred_fallthru
          _
      $region12: #{tpu_custom_call.1} parent=5 // pred_fallthru
        _
      %p359 = scmp.lt.s32.totalorder %s24, 2
      // Predicated region
      $region45: #{tpu_custom_call.1} parent=5 // pred_check
        %p360 = pneg %p359
      $region46: #{tpu_custom_call.1} parent=5 // pred_check_branch
        %362 = sbr.rel (%p360) target = $region48
      $region47: #{tpu_custom_call.1} parent=5 // pred_region
        // Predicated region
        $region49: #{tpu_custom_call.1} parent=47 // pred_check
          %p363 = pneg %p58
        $region50: #{tpu_custom_call.1} parent=47 // pred_check_branch
          %365 = sbr.rel (%p363) target = $region52
        $region51: #{tpu_custom_call.1} parent=47 // pred_region
          %s366 = sand.u32 %s48, 1
          %s367 = scalar_lea.sflag [#allocation5], %s366
          %s368 = sand.u32 %s48, 1
          %s369 = smul.addr %s368, 8
          %s370 = scalar_lea.vmem [#allocation4], %s369
          %s372 = ssub.s32 128, 128
          %373 = vsyncadd %s367, %s372
          %s374 = sadd.s32 %s32, %s31
          %s375 = smul.addr %s374, 128
          %s376 = scalar_lea.hbm %s0, %s375
          %s378 = sshll.u32 %s370, 4
          %s379 = int_to_ptr.vmem [resolvable:$true] %s378
          %381 = dma.hbm_to_vmem [thread:$0]  %s376, 128, %s379, %s367
        $region52: #{tpu_custom_call.1} parent=47 // pred_fallthru
          _
      $region48: #{tpu_custom_call.1} parent=5 // pred_fallthru
        _
      %p382 = scmp.le.s32.totalorder 1, %s24
      %p383 = scmp.lt.s32.totalorder %s24, 3
      %p384 = pnand %p382, %p383
      %p385 = pneg %p384
      // Predicated region
      $region53: #{tpu_custom_call.1} parent=5 // pred_check
        _
      $region54: #{tpu_custom_call.1} parent=5 // pred_check_branch
        %387 = sbr.rel (%p384) target = $region56
      $region55: #{tpu_custom_call.1} parent=5 // pred_region
        %s388 = ssub.s32 %s24, 1
        %s389 = sand.u32 %s51, 1
        %s390 = scalar_lea.sflag [#allocation5], %s389
        %s391 = sand.u32 %s51, 1
        %s392 = smul.addr %s391, 8
        %s393 = scalar_lea.vmem [#allocation4], %s392
        // Predicated region
        $region57: #{tpu_custom_call.1} parent=55 // pred_check
          %p394 = pneg %p64
        $region58: #{tpu_custom_call.1} parent=55 // pred_check_branch
          %396 = sbr.rel (%p394) target = $region60
        $region59: #{tpu_custom_call.1} parent=55 // pred_region
          %397 = dma.done %s390, 128
        $region60: #{tpu_custom_call.1} parent=55 // pred_fallthru
          _
        // Predicated region
        $region61: #{tpu_custom_call.1} parent=55 // pred_check
          %p398 = pneg %p90
        $region62: #{tpu_custom_call.1} parent=55 // pred_check_branch
          %400 = sbr.rel (%p398) target = $region64
        $region63: #{tpu_custom_call.1} parent=55 // pred_region
          %401 = dma.done [#allocation8], 128
        $region64: #{tpu_custom_call.1} parent=55 // pred_fallthru
          _
        // Predicated region
        $region65: #{tpu_custom_call.1} parent=55 // pred_check
          %p402 = pneg %p116
        $region66: #{tpu_custom_call.1} parent=55 // pred_check_branch
          %404 = sbr.rel (%p402) target = $region68
        $region67: #{tpu_custom_call.1} parent=55 // pred_region
          %405 = dma.done [#allocation8], 128
        $region68: #{tpu_custom_call.1} parent=55 // pred_fallthru
          _
        // Predicated region
        $region69: #{tpu_custom_call.1} parent=55 // pred_check
          %p406 = pneg %p137
        $region70: #{tpu_custom_call.1} parent=55 // pred_check_branch
          %408 = sbr.rel (%p406) target = $region72
        $region71: #{tpu_custom_call.1} parent=55 // pred_region
          %409 = dma.done [#allocation11], 256
        $region72: #{tpu_custom_call.1} parent=55 // pred_fallthru
          _
        // Predicated region
        $region73: #{tpu_custom_call.1} parent=55 // pred_check
          %p410 = pneg %p179
        $region74: #{tpu_custom_call.1} parent=55 // pred_check_branch
          %412 = sbr.rel (%p410) target = $region76
        $region75: #{tpu_custom_call.1} parent=55 // pred_region
          %413 = dma.done [#allocation11], 256
        $region76: #{tpu_custom_call.1} parent=55 // pred_fallthru
          _
        // Predicated region
        $region77: #{tpu_custom_call.1} parent=55 // pred_check
          %p414 = pneg %p221
        $region78: #{tpu_custom_call.1} parent=55 // pred_check_branch
          %416 = sbr.rel (%p414) target = $region80
        $region79: #{tpu_custom_call.1} parent=55 // pred_region
          %417 = dma.done [#allocation14], 256
        $region80: #{tpu_custom_call.1} parent=55 // pred_fallthru
          _
        %s418 = sand.u32 %s51, 1
        %s419 = scalar_lea.sflag [#allocation5], %s418
        %s420 = sand.u32 %s51, 1
        %s421 = smul.addr %s420, 8
        %s422 = scalar_lea.vmem [#allocation4], %s421
        %p423 = pneg %p64
        %p424 = pneg %p61
        %p425 = pneg %p90
        %p426 = pneg %p87
        %p427 = pneg %p116
        %p428 = pneg %p113
        %p429 = pneg %p137
        %p430 = pneg %p134
        %p431 = pneg %p158
        %p432 = pneg %p155
        %p433 = pneg %p179
        %p434 = pneg %p176
        %p435 = pneg %p200
        %p436 = pneg %p197
        %p437 = pneg %p221
        %p438 = pneg %p218
        %p439 = pneg %p242
        %p440 = pneg %p239
        %p441 = pneg %p270
        %p442 = pneg %p267
        %s443 = sand.u32 %s257, 1
        %s444 = scalar_lea.sflag [#allocation6], %s443
        %s445 = sand.u32 %s257, 1
        %s446 = smul.addr %s445, 8
        %s447 = scalar_lea.vmem [#allocation15], %s446
        %p449 = scmp.eq.s32.totalorder %s34, 0
        // Predicated region
        $region81: #{tpu_custom_call.1} parent=55 // pred_check
          %p450 = pneg %p449
        $region82: #{tpu_custom_call.1} parent=55 // pred_check_branch
          %452 = sbr.rel (%p450) target = $region84
        $region83: #{tpu_custom_call.1} parent=55 // pred_region
          %v453 = vld [vmem:[#allocation7] sm:$0xff]
          %v454 = vpack.c.bf16 %v453, %v453
          %v455 = vld [vmem:[#allocation9] sm:$0xff]
          %v456 = vpack.c.bf16 %v455, %v455
          %v457 = vld [vmem:[#allocation12] sm:$0xf]
          %v458 = vld [vmem:[#allocation12 + $0x4] sm:$0xf]
          %v459 = vld [vmem:[#allocation12 + $0x8] sm:$0xf]
          %v460 = vld [vmem:[#allocation12 + $0xc] sm:$0xf]
          %v461 = vld [vmem:[%s6] sm:$0x1]
          %v463 = vlaneseq
          %v464 = vshrl.u32 %v463, 7
          %v465 = vsub.s32 0, %v464
          %v466 = vrot.slane %v461, %v465
          %v472 = vunpack.c.l.b16 %v457
          %v473 = vunpack.c.l.b16 %v458
          %v474 = vunpack.c.l.b16 %v459
          %v475 = vunpack.c.l.b16 %v460
          %v476 = vpack.c.b16 %v473, %v472
          %v477 = vpack.c.b16 %v475, %v474
          %vm480 = vcmask 261120
          %v482 = vsel %vm480, %v454, 0
          %484 = vmatprep.subr.bf16.mxu0 0
          %485 = vmatpush1.bf16.msra.mxu0 0
          %486 = vmatprep.subr.bf16.mxu0 0
          %487 = vmatpush1.bf16.msra.mxu0 0
          %488 = vmatprep.subr.bf16.mxu0 0
          %489 = vmatpush1.bf16.msra.mxu0 0
          %490 = vmatprep.subr.bf16.mxu0 0
          %491 = vmatpush1.bf16.msra.mxu0 0
          %492 = vmatprep.subr.bf16.mxu0 0
          %493 = vmatpush1.bf16.msra.mxu0 0
          %494 = vmatprep.subr.bf16.mxu0 0
          %495 = vmatpush1.bf16.msra.mxu0 0
          %496 = vmatprep.subr.bf16.mxu0 0
          %497 = vmatpush1.bf16.msra.mxu0 %v477
          %498 = vmatprep.subr.bf16.mxu0 0
          %499 = vmatpush1.bf16.msra.mxu0 %v476
          %500 = vmatprep.subr.bf16.mxu0 0
          %501 = vmatpush2.bf16.msra.mxu0 0
          %502 = vmatprep.subr.bf16.mxu0 0
          %503 = vmatpush2.bf16.msra.mxu0 0
          %504 = vmatprep.subr.bf16.mxu0 0
          %505 = vmatpush2.bf16.msra.mxu0 0
          %506 = vmatprep.subr.bf16.mxu0 0
          %507 = vmatpush2.bf16.msra.mxu0 0
          %508 = vmatprep.subr.bf16.mxu0 0
          %509 = vmatpush2.bf16.msra.mxu0 0
          %510 = vmatprep.subr.bf16.mxu0 0
          %511 = vmatpush2.bf16.msra.mxu0 0
          %512 = vmatprep.subr.bf16.mxu0 0
          %513 = vmatpush2.bf16.msra.mxu0 0
          %514 = vmatprep.subr.bf16.mxu0 0
          %515 = vmatpush2.bf16.msra.mxu0 0
          %516 = vmatprep.mubr.bf16.mxu0 0
          %517 = vmatmul.mubr.bf16.gmra.mxu0 %v482
          %v518 = vpop.f32.mrf.mxu0
          %v519 = vadd.f32 %v466, %v518
          %v520 = vpop.f32.mrf.mxu0
          %v521 = vpop.f32.mrf.mxu0
          %v522 = vpop.f32.mrf.mxu0
          %523 = vdwg.mxu0
          %v524 = vpack.c.bf16 %v519, %v519
          %v525 = vld [vmem:[#allocation13] sm:$0xf]
          %v526 = vld [vmem:[#allocation13 + $0x4] sm:$0xf]
          %v527 = vld [vmem:[#allocation13 + $0x8] sm:$0xf]
          %v528 = vld [vmem:[#allocation13 + $0xc] sm:$0xf]
          %v529 = vld [vmem:[%s8] sm:$0x1]
          %v531 = vlaneseq
          %v532 = vshrl.u32 %v531, 7
          %v533 = vsub.s32 0, %v532
          %v534 = vrot.slane %v529, %v533
          %v540 = vunpack.c.l.b16 %v525
          %v541 = vunpack.c.l.b16 %v526
          %v542 = vunpack.c.l.b16 %v527
          %v543 = vunpack.c.l.b16 %v528
          %v544 = vpack.c.b16 %v541, %v540
          %v545 = vpack.c.b16 %v543, %v542
          %v549 = vsel %vm480, %v456, 0
          %551 = vmatprep.subr.bf16.mxu0 0
          %552 = vmatpush1.bf16.msra.mxu0 0
          %553 = vmatprep.subr.bf16.mxu0 0
          %554 = vmatpush1.bf16.msra.mxu0 0
          %555 = vmatprep.subr.bf16.mxu0 0
          %556 = vmatpush1.bf16.msra.mxu0 0
          %557 = vmatprep.subr.bf16.mxu0 0
          %558 = vmatpush1.bf16.msra.mxu0 0
          %559 = vmatprep.subr.bf16.mxu0 0
          %560 = vmatpush1.bf16.msra.mxu0 0
          %561 = vmatprep.subr.bf16.mxu0 0
          %562 = vmatpush1.bf16.msra.mxu0 0
          %563 = vmatprep.subr.bf16.mxu0 0
          %564 = vmatpush1.bf16.msra.mxu0 %v545
          %565 = vmatprep.subr.bf16.mxu0 0
          %566 = vmatpush1.bf16.msra.mxu0 %v544
          %567 = vmatprep.subr.bf16.mxu0 0
          %568 = vmatpush2.bf16.msra.mxu0 0
          %569 = vmatprep.subr.bf16.mxu0 0
          %570 = vmatpush2.bf16.msra.mxu0 0
          %571 = vmatprep.subr.bf16.mxu0 0
          %572 = vmatpush2.bf16.msra.mxu0 0
          %573 = vmatprep.subr.bf16.mxu0 0
          %574 = vmatpush2.bf16.msra.mxu0 0
          %575 = vmatprep.subr.bf16.mxu0 0
          %576 = vmatpush2.bf16.msra.mxu0 0
          %577 = vmatprep.subr.bf16.mxu0 0
          %578 = vmatpush2.bf16.msra.mxu0 0
          %579 = vmatprep.subr.bf16.mxu0 0
          %580 = vmatpush2.bf16.msra.mxu0 0
          %581 = vmatprep.subr.bf16.mxu0 0
          %582 = vmatpush2.bf16.msra.mxu0 0
          %583 = vmatprep.mubr.bf16.mxu0 0
          %584 = vmatmul.mubr.bf16.gmra.mxu0 %v549
          %v585 = vpop.f32.mrf.mxu0
          %v586 = vadd.f32 %v534, %v585
          %v587 = vpop.f32.mrf.mxu0
          %v588 = vpop.f32.mrf.mxu0
          %v589 = vpop.f32.mrf.mxu0
          %590 = vdwg.mxu0
          %v591 = vpack.c.bf16 %v586, %v586
          %vm592 = vcmask 60416
          %593 = vst.msk [vmem:[#allocation2] sm:$0xf] %vm592, %v524
          %594 = vst.msk [vmem:[#allocation3] sm:$0xf] %vm592, %v591
          %v596 = vunpack.c.l.b16 %v524
          %v597 = vpack.c.b16 %v596, %v596
          %598 = vrot.lane.b32.xlu0 %v597, 120
          %v599 = vpop.permute.xlu0 %598
          %s601 = scalar_lea.vmem [#allocation2], 4
          %602 = vst.msk [vmem:[%s601] sm:$0xf] %vm592, %v599
          %v604 = vunpack.c.l.b16 %v591
          %v605 = vpack.c.b16 %v604, %v604
          %606 = vrot.lane.b32.xlu0 %v605, 120
          %v607 = vpop.permute.xlu0 %606
          %s609 = scalar_lea.vmem [#allocation3], 4
          %610 = vst.msk [vmem:[%s609] sm:$0xf] %vm592, %v607
          %611 = vrot.lane.b32.xlu0 %v597, 112
          %v612 = vpop.permute.xlu0 %611
          %s614 = scalar_lea.vmem [#allocation2], 8
          %615 = vst.msk [vmem:[%s614] sm:$0xf] %vm592, %v612
          %616 = vrot.lane.b32.xlu0 %v605, 112
          %v617 = vpop.permute.xlu0 %616
          %s619 = scalar_lea.vmem [#allocation3], 8
          %620 = vst.msk [vmem:[%s619] sm:$0xf] %vm592, %v617
          %621 = vrot.lane.b32.xlu0 %v597, 104
          %v622 = vpop.permute.xlu0 %621
          %s624 = scalar_lea.vmem [#allocation2], 12
          %625 = vst.msk [vmem:[%s624] sm:$0xf] %vm592, %v622
          %626 = vrot.lane.b32.xlu0 %v605, 104
          %v627 = vpop.permute.xlu0 %626
          %s629 = scalar_lea.vmem [#allocation3], 12
          %630 = vst.msk [vmem:[%s629] sm:$0xf] %vm592, %v627
        $region84: #{tpu_custom_call.1} parent=55 // pred_fallthru
          _
        %v631 = vld [vmem:[%s393] sm:$0xff]
        %v632 = vpack.c.bf16 %v631, %v631
        %v633 = vld [vmem:[#allocation10] sm:$0xf]
        %v634 = vld [vmem:[#allocation10 + $0x4] sm:$0xf]
        %v635 = vld [vmem:[#allocation10 + $0x8] sm:$0xf]
        %v636 = vld [vmem:[#allocation10 + $0xc] sm:$0xf]
        %v637 = vld [vmem:[%s4] sm:$0x1]
        %v639 = vlaneseq
        %v640 = vshrl.u32 %v639, 7
        %v641 = vsub.s32 0, %v640
        %v642 = vrot.slane %v637, %v641
        %v648 = vunpack.c.l.b16 %v633
        %v649 = vunpack.c.l.b16 %v634
        %v650 = vunpack.c.l.b16 %v635
        %v651 = vunpack.c.l.b16 %v636
        %v652 = vpack.c.b16 %v649, %v648
        %v653 = vpack.c.b16 %v651, %v650
        %vm656 = vcmask 261120
        %v658 = vsel %vm656, %v632, 0
        %660 = vmatprep.subr.bf16.mxu0 0
        %661 = vmatpush1.bf16.msra.mxu0 0
        %662 = vmatprep.subr.bf16.mxu0 0
        %663 = vmatpush1.bf16.msra.mxu0 0
        %664 = vmatprep.subr.bf16.mxu0 0
        %665 = vmatpush1.bf16.msra.mxu0 0
        %666 = vmatprep.subr.bf16.mxu0 0
        %667 = vmatpush1.bf16.msra.mxu0 0
        %668 = vmatprep.subr.bf16.mxu0 0
        %669 = vmatpush1.bf16.msra.mxu0 0
        %670 = vmatprep.subr.bf16.mxu0 0
        %671 = vmatpush1.bf16.msra.mxu0 0
        %672 = vmatprep.subr.bf16.mxu0 0
        %673 = vmatpush1.bf16.msra.mxu0 %v653
        %674 = vmatprep.subr.bf16.mxu0 0
        %675 = vmatpush1.bf16.msra.mxu0 %v652
        %676 = vmatprep.subr.bf16.mxu0 0
        %677 = vmatpush2.bf16.msra.mxu0 0
        %678 = vmatprep.subr.bf16.mxu0 0
        %679 = vmatpush2.bf16.msra.mxu0 0
        %680 = vmatprep.subr.bf16.mxu0 0
        %681 = vmatpush2.bf16.msra.mxu0 0
        %682 = vmatprep.subr.bf16.mxu0 0
        %683 = vmatpush2.bf16.msra.mxu0 0
        %684 = vmatprep.subr.bf16.mxu0 0
        %685 = vmatpush2.bf16.msra.mxu0 0
        %686 = vmatprep.subr.bf16.mxu0 0
        %687 = vmatpush2.bf16.msra.mxu0 0
        %688 = vmatprep.subr.bf16.mxu0 0
        %689 = vmatpush2.bf16.msra.mxu0 0
        %690 = vmatprep.subr.bf16.mxu0 0
        %691 = vmatpush2.bf16.msra.mxu0 0
        %692 = vmatprep.mubr.bf16.mxu0 0
        %693 = vmatmul.mubr.bf16.gmra.mxu0 %v658
        %v694 = vpop.f32.mrf.mxu0
        %v695 = vadd.f32 %v642, %v694
        %v696 = vpop.f32.mrf.mxu0
        %v697 = vpop.f32.mrf.mxu0
        %v698 = vpop.f32.mrf.mxu0
        %699 = vdwg.mxu0
        %v700 = vmul.f32 %v695, 0.35355338
        %v701 = vpack.c.bf16 %v700, %v700
        %v702 = vld [vmem:[#allocation2] sm:$0xf]
        %v703 = vld [vmem:[#allocation3] sm:$0xf]
        %vm704 = vcmask 64512
        %v706 = vsel %vm704, %v701, 0
        %v709 = vsel %vm704, %v702, 0
        %711 = vmatprep.subr.bf16.mxu0 0
        %712 = vmatpush1.bf16.xpose.msra.mxu0 0
        %713 = vmatprep.subr.bf16.mxu0 0
        %714 = vmatpush1.bf16.xpose.msra.mxu0 0
        %715 = vmatprep.subr.bf16.mxu0 0
        %716 = vmatpush1.bf16.xpose.msra.mxu0 0
        %717 = vmatprep.subr.bf16.mxu0 0
        %718 = vmatpush1.bf16.xpose.msra.mxu0 0
        %719 = vmatprep.subr.bf16.mxu0 0
        %720 = vmatpush1.bf16.xpose.msra.mxu0 0
        %721 = vmatprep.subr.bf16.mxu0 0
        %722 = vmatpush1.bf16.xpose.msra.mxu0 0
        %723 = vmatprep.subr.bf16.mxu0 0
        %724 = vmatpush1.bf16.xpose.msra.mxu0 0
        %725 = vmatprep.subr.bf16.mxu0 0
        %726 = vmatpush1.bf16.xpose.msra.mxu0 %v709
        %727 = vmatprep.subr.bf16.mxu0 0
        %728 = vmatpush2.bf16.xpose.msra.mxu0 0
        %729 = vmatprep.subr.bf16.mxu0 0
        %730 = vmatpush2.bf16.xpose.msra.mxu0 0
        %731 = vmatprep.subr.bf16.mxu0 0
        %732 = vmatpush2.bf16.xpose.msra.mxu0 0
        %733 = vmatprep.subr.bf16.mxu0 0
        %734 = vmatpush2.bf16.xpose.msra.mxu0 0
        %735 = vmatprep.subr.bf16.mxu0 0
        %736 = vmatpush2.bf16.xpose.msra.mxu0 0
        %737 = vmatprep.subr.bf16.mxu0 0
        %738 = vmatpush2.bf16.xpose.msra.mxu0 0
        %739 = vmatprep.subr.bf16.mxu0 0
        %740 = vmatpush2.bf16.xpose.msra.mxu0 0
        %741 = vmatprep.subr.bf16.mxu0 0
        %742 = vmatpush2.bf16.xpose.msra.mxu0 0
        %743 = vmatprep.mubr.bf16.mxu0 0
        %744 = vmatmul.mubr.bf16.gmra.mxu0 %v706
        %v745 = vpop.f32.mrf.mxu0
        %v746 = vadd.f32 0.0, %v745
        %v747 = vpop.f32.mrf.mxu0
        %v748 = vpop.f32.mrf.mxu0
        %v749 = vpop.f32.mrf.mxu0
        %750 = vdwg.mxu0
        %v751 = vsel %vm704, %v746, -inf
        %752 = vmax.xlane.f32.xlu0 %v751
        %v753 = vpop.xlane.xlu0 %752
        %v754 = vsub.f32 %v746, %v753
        %v755 = vmul.f32 %v754, 1.442695
        %v756 = vpow.pop %v755
        %v757 = vsel %vm704, %v756, 0.0
        %758 = vadd.xlane.f32.xlu0 %v757
        %v759 = vpop.xlane.xlu0 %758
        %v760 = vpack.c.bf16 %v756, %v756
        %v762 = vsel %vm704, %v760, 0
        %vm764 = vcmask 1043456
        %v766 = vsel %vm764, %v703, 0
        %768 = vmatprep.subr.bf16.mxu0 0
        %769 = vmatpush1.bf16.msra.mxu0 0
        %770 = vmatprep.subr.bf16.mxu0 0
        %771 = vmatpush1.bf16.msra.mxu0 0
        %772 = vmatprep.subr.bf16.mxu0 0
        %773 = vmatpush1.bf16.msra.mxu0 0
        %774 = vmatprep.subr.bf16.mxu0 0
        %775 = vmatpush1.bf16.msra.mxu0 0
        %776 = vmatprep.subr.bf16.mxu0 0
        %777 = vmatpush1.bf16.msra.mxu0 0
        %778 = vmatprep.subr.bf16.mxu0 0
        %779 = vmatpush1.bf16.msra.mxu0 0
        %780 = vmatprep.subr.bf16.mxu0 0
        %781 = vmatpush1.bf16.msra.mxu0 0
        %782 = vmatprep.subr.bf16.mxu0 0
        %783 = vmatpush1.bf16.msra.mxu0 %v766
        %784 = vmatprep.subr.bf16.mxu0 0
        %785 = vmatpush2.bf16.msra.mxu0 0
        %786 = vmatprep.subr.bf16.mxu0 0
        %787 = vmatpush2.bf16.msra.mxu0 0
        %788 = vmatprep.subr.bf16.mxu0 0
        %789 = vmatpush2.bf16.msra.mxu0 0
        %790 = vmatprep.subr.bf16.mxu0 0
        %791 = vmatpush2.bf16.msra.mxu0 0
        %792 = vmatprep.subr.bf16.mxu0 0
        %793 = vmatpush2.bf16.msra.mxu0 0
        %794 = vmatprep.subr.bf16.mxu0 0
        %795 = vmatpush2.bf16.msra.mxu0 0
        %796 = vmatprep.subr.bf16.mxu0 0
        %797 = vmatpush2.bf16.msra.mxu0 0
        %798 = vmatprep.subr.bf16.mxu0 0
        %799 = vmatpush2.bf16.msra.mxu0 0
        %800 = vmatprep.mubr.bf16.mxu0 0
        %801 = vmatmul.mubr.bf16.gmra.mxu0 %v762
        %v802 = vpop.f32.mrf.mxu0
        %v803 = vadd.f32 0.0, %v802
        %v804 = vpop.f32.mrf.mxu0
        %v805 = vpop.f32.mrf.mxu0
        %v806 = vpop.f32.mrf.mxu0
        %807 = vdwg.mxu0
        %v808 = vrcp.pop %v759
        %v809 = vmul.f32 %v803, %v808
        %810 = vst.msk [vmem:[%s447] sm:$0xff] %vm704, %v809
        %s811 = scalar_lea.vmem [#allocation2], 4
        %v812 = vld [vmem:[%s811] sm:$0xf]
        %s813 = scalar_lea.vmem [#allocation3], 4
        %v814 = vld [vmem:[%s813] sm:$0xf]
        %816 = vrot.lane.b32.xlu0 %v701, 120
        %v817 = vpop.permute.xlu0 %816
        %v819 = vsel %vm704, %v817, 0
        %v822 = vsel %vm704, %v812, 0
        %824 = vmatprep.subr.bf16.mxu0 0
        %825 = vmatpush1.bf16.xpose.msra.mxu0 0
        %826 = vmatprep.subr.bf16.mxu0 0
        %827 = vmatpush1.bf16.xpose.msra.mxu0 0
        %828 = vmatprep.subr.bf16.mxu0 0
        %829 = vmatpush1.bf16.xpose.msra.mxu0 0
        %830 = vmatprep.subr.bf16.mxu0 0
        %831 = vmatpush1.bf16.xpose.msra.mxu0 0
        %832 = vmatprep.subr.bf16.mxu0 0
        %833 = vmatpush1.bf16.xpose.msra.mxu0 0
        %834 = vmatprep.subr.bf16.mxu0 0
        %835 = vmatpush1.bf16.xpose.msra.mxu0 0
        %836 = vmatprep.subr.bf16.mxu0 0
        %837 = vmatpush1.bf16.xpose.msra.mxu0 0
        %838 = vmatprep.subr.bf16.mxu0 0
        %839 = vmatpush1.bf16.xpose.msra.mxu0 %v822
        %840 = vmatprep.subr.bf16.mxu0 0
        %841 = vmatpush2.bf16.xpose.msra.mxu0 0
        %842 = vmatprep.subr.bf16.mxu0 0
        %843 = vmatpush2.bf16.xpose.msra.mxu0 0
        %844 = vmatprep.subr.bf16.mxu0 0
        %845 = vmatpush2.bf16.xpose.msra.mxu0 0
        %846 = vmatprep.subr.bf16.mxu0 0
        %847 = vmatpush2.bf16.xpose.msra.mxu0 0
        %848 = vmatprep.subr.bf16.mxu0 0
        %849 = vmatpush2.bf16.xpose.msra.mxu0 0
        %850 = vmatprep.subr.bf16.mxu0 0
        %851 = vmatpush2.bf16.xpose.msra.mxu0 0
        %852 = vmatprep.subr.bf16.mxu0 0
        %853 = vmatpush2.bf16.xpose.msra.mxu0 0
        %854 = vmatprep.subr.bf16.mxu0 0
        %855 = vmatpush2.bf16.xpose.msra.mxu0 0
        %856 = vmatprep.mubr.bf16.mxu0 0
        %857 = vmatmul.mubr.bf16.gmra.mxu0 %v819
        %v858 = vpop.f32.mrf.mxu0
        %v859 = vadd.f32 0.0, %v858
        %v860 = vpop.f32.mrf.mxu0
        %v861 = vpop.f32.mrf.mxu0
        %v862 = vpop.f32.mrf.mxu0
        %863 = vdwg.mxu0
        %v864 = vsel %vm704, %v859, -inf
        %865 = vmax.xlane.f32.xlu0 %v864
        %v866 = vpop.xlane.xlu0 %865
        %v867 = vsub.f32 %v859, %v866
        %v868 = vmul.f32 %v867, 1.442695
        %v869 = vpow.pop %v868
        %v870 = vsel %vm704, %v869, 0.0
        %871 = vadd.xlane.f32.xlu0 %v870
        %v872 = vpop.xlane.xlu0 %871
        %v873 = vpack.c.bf16 %v869, %v869
        %v875 = vsel %vm704, %v873, 0
        %v878 = vsel %vm764, %v814, 0
        %880 = vmatprep.subr.bf16.mxu0 0
        %881 = vmatpush1.bf16.msra.mxu0 0
        %882 = vmatprep.subr.bf16.mxu0 0
        %883 = vmatpush1.bf16.msra.mxu0 0
        %884 = vmatprep.subr.bf16.mxu0 0
        %885 = vmatpush1.bf16.msra.mxu0 0
        %886 = vmatprep.subr.bf16.mxu0 0
        %887 = vmatpush1.bf16.msra.mxu0 0
        %888 = vmatprep.subr.bf16.mxu0 0
        %889 = vmatpush1.bf16.msra.mxu0 0
        %890 = vmatprep.subr.bf16.mxu0 0
        %891 = vmatpush1.bf16.msra.mxu0 0
        %892 = vmatprep.subr.bf16.mxu0 0
        %893 = vmatpush1.bf16.msra.mxu0 0
        %894 = vmatprep.subr.bf16.mxu0 0
        %895 = vmatpush1.bf16.msra.mxu0 %v878
        %896 = vmatprep.subr.bf16.mxu0 0
        %897 = vmatpush2.bf16.msra.mxu0 0
        %898 = vmatprep.subr.bf16.mxu0 0
        %899 = vmatpush2.bf16.msra.mxu0 0
        %900 = vmatprep.subr.bf16.mxu0 0
        %901 = vmatpush2.bf16.msra.mxu0 0
        %902 = vmatprep.subr.bf16.mxu0 0
        %903 = vmatpush2.bf16.msra.mxu0 0
        %904 = vmatprep.subr.bf16.mxu0 0
        %905 = vmatpush2.bf16.msra.mxu0 0
        %906 = vmatprep.subr.bf16.mxu0 0
        %907 = vmatpush2.bf16.msra.mxu0 0
        %908 = vmatprep.subr.bf16.mxu0 0
        %909 = vmatpush2.bf16.msra.mxu0 0
        %910 = vmatprep.subr.bf16.mxu0 0
        %911 = vmatpush2.bf16.msra.mxu0 0
        %912 = vmatprep.mubr.bf16.mxu0 0
        %913 = vmatmul.mubr.bf16.gmra.mxu0 %v875
        %v914 = vpop.f32.mrf.mxu0
        %v915 = vadd.f32 0.0, %v914
        %v916 = vpop.f32.mrf.mxu0
        %v917 = vpop.f32.mrf.mxu0
        %v918 = vpop.f32.mrf.mxu0
        %919 = vdwg.mxu0
        %v920 = vrcp.pop %v872
        %v921 = vmul.f32 %v915, %v920
        %923 = vrot.lane.b32.xlu0 %v921, 8
        %v924 = vpop.permute.xlu0 %923
        %vm926 = vcmask 130112
        %927 = vst.msk [vmem:[%s447] sm:$0xff] %vm926, %v924
        %s928 = scalar_lea.vmem [#allocation2], 8
        %v929 = vld [vmem:[%s928] sm:$0xf]
        %s930 = scalar_lea.vmem [#allocation3], 8
        %v931 = vld [vmem:[%s930] sm:$0xf]
        %932 = vrot.lane.b32.xlu0 %v701, 112
        %v933 = vpop.permute.xlu0 %932
        %v935 = vsel %vm704, %v933, 0
        %v938 = vsel %vm704, %v929, 0
        %940 = vmatprep.subr.bf16.mxu0 0
        %941 = vmatpush1.bf16.xpose.msra.mxu0 0
        %942 = vmatprep.subr.bf16.mxu0 0
        %943 = vmatpush1.bf16.xpose.msra.mxu0 0
        %944 = vmatprep.subr.bf16.mxu0 0
        %945 = vmatpush1.bf16.xpose.msra.mxu0 0
        %946 = vmatprep.subr.bf16.mxu0 0
        %947 = vmatpush1.bf16.xpose.msra.mxu0 0
        %948 = vmatprep.subr.bf16.mxu0 0
        %949 = vmatpush1.bf16.xpose.msra.mxu0 0
        %950 = vmatprep.subr.bf16.mxu0 0
        %951 = vmatpush1.bf16.xpose.msra.mxu0 0
        %952 = vmatprep.subr.bf16.mxu0 0
        %953 = vmatpush1.bf16.xpose.msra.mxu0 0
        %954 = vmatprep.subr.bf16.mxu0 0
        %955 = vmatpush1.bf16.xpose.msra.mxu0 %v938
        %956 = vmatprep.subr.bf16.mxu0 0
        %957 = vmatpush2.bf16.xpose.msra.mxu0 0
        %958 = vmatprep.subr.bf16.mxu0 0
        %959 = vmatpush2.bf16.xpose.msra.mxu0 0
        %960 = vmatprep.subr.bf16.mxu0 0
        %961 = vmatpush2.bf16.xpose.msra.mxu0 0
        %962 = vmatprep.subr.bf16.mxu0 0
        %963 = vmatpush2.bf16.xpose.msra.mxu0 0
        %964 = vmatprep.subr.bf16.mxu0 0
        %965 = vmatpush2.bf16.xpose.msra.mxu0 0
        %966 = vmatprep.subr.bf16.mxu0 0
        %967 = vmatpush2.bf16.xpose.msra.mxu0 0
        %968 = vmatprep.subr.bf16.mxu0 0
        %969 = vmatpush2.bf16.xpose.msra.mxu0 0
        %970 = vmatprep.subr.bf16.mxu0 0
        %971 = vmatpush2.bf16.xpose.msra.mxu0 0
        %972 = vmatprep.mubr.bf16.mxu0 0
        %973 = vmatmul.mubr.bf16.gmra.mxu0 %v935
        %v974 = vpop.f32.mrf.mxu0
        %v975 = vadd.f32 0.0, %v974
        %v976 = vpop.f32.mrf.mxu0
        %v977 = vpop.f32.mrf.mxu0
        %v978 = vpop.f32.mrf.mxu0
        %979 = vdwg.mxu0
        %v980 = vsel %vm704, %v975, -inf
        %981 = vmax.xlane.f32.xlu0 %v980
        %v982 = vpop.xlane.xlu0 %981
        %v983 = vsub.f32 %v975, %v982
        %v984 = vmul.f32 %v983, 1.442695
        %v985 = vpow.pop %v984
        %v986 = vsel %vm704, %v985, 0.0
        %987 = vadd.xlane.f32.xlu0 %v986
        %v988 = vpop.xlane.xlu0 %987
        %v989 = vpack.c.bf16 %v985, %v985
        %v991 = vsel %vm704, %v989, 0
        %v994 = vsel %vm764, %v931, 0
        %996 = vmatprep.subr.bf16.mxu0 0
        %997 = vmatpush1.bf16.msra.mxu0 0
        %998 = vmatprep.subr.bf16.mxu0 0
        %999 = vmatpush1.bf16.msra.mxu0 0
        %1000 = vmatprep.subr.bf16.mxu0 0
        %1001 = vmatpush1.bf16.msra.mxu0 0
        %1002 = vmatprep.subr.bf16.mxu0 0
        %1003 = vmatpush1.bf16.msra.mxu0 0
        %1004 = vmatprep.subr.bf16.mxu0 0
        %1005 = vmatpush1.bf16.msra.mxu0 0
        %1006 = vmatprep.subr.bf16.mxu0 0
        %1007 = vmatpush1.bf16.msra.mxu0 0
        %1008 = vmatprep.subr.bf16.mxu0 0
        %1009 = vmatpush1.bf16.msra.mxu0 0
        %1010 = vmatprep.subr.bf16.mxu0 0
        %1011 = vmatpush1.bf16.msra.mxu0 %v994
        %1012 = vmatprep.subr.bf16.mxu0 0
        %1013 = vmatpush2.bf16.msra.mxu0 0
        %1014 = vmatprep.subr.bf16.mxu0 0
        %1015 = vmatpush2.bf16.msra.mxu0 0
        %1016 = vmatprep.subr.bf16.mxu0 0
        %1017 = vmatpush2.bf16.msra.mxu0 0
        %1018 = vmatprep.subr.bf16.mxu0 0
        %1019 = vmatpush2.bf16.msra.mxu0 0
        %1020 = vmatprep.subr.bf16.mxu0 0
        %1021 = vmatpush2.bf16.msra.mxu0 0
        %1022 = vmatprep.subr.bf16.mxu0 0
        %1023 = vmatpush2.bf16.msra.mxu0 0
        %1024 = vmatprep.subr.bf16.mxu0 0
        %1025 = vmatpush2.bf16.msra.mxu0 0
        %1026 = vmatprep.subr.bf16.mxu0 0
        %1027 = vmatpush2.bf16.msra.mxu0 0
        %1028 = vmatprep.mubr.bf16.mxu0 0
        %1029 = vmatmul.mubr.bf16.gmra.mxu0 %v991
        %v1030 = vpop.f32.mrf.mxu0
        %v1031 = vadd.f32 0.0, %v1030
        %v1032 = vpop.f32.mrf.mxu0
        %v1033 = vpop.f32.mrf.mxu0
        %v1034 = vpop.f32.mrf.mxu0
        %1035 = vdwg.mxu0
        %v1036 = vrcp.pop %v988
        %v1037 = vmul.f32 %v1031, %v1036
        %1039 = vrot.lane.b32.xlu0 %v1037, 16
        %v1040 = vpop.permute.xlu0 %1039
        %vm1042 = vcmask 195712
        %1043 = vst.msk [vmem:[%s447] sm:$0xff] %vm1042, %v1040
        %s1044 = scalar_lea.vmem [#allocation2], 12
        %v1045 = vld [vmem:[%s1044] sm:$0xf]
        %s1046 = scalar_lea.vmem [#allocation3], 12
        %v1047 = vld [vmem:[%s1046] sm:$0xf]
        %1048 = vrot.lane.b32.xlu0 %v701, 104
        %v1049 = vpop.permute.xlu0 %1048
        %v1051 = vsel %vm704, %v1049, 0
        %v1054 = vsel %vm704, %v1045, 0
        %1056 = vmatprep.subr.bf16.mxu0 0
        %1057 = vmatpush1.bf16.xpose.msra.mxu0 0
        %1058 = vmatprep.subr.bf16.mxu0 0
        %1059 = vmatpush1.bf16.xpose.msra.mxu0 0
        %1060 = vmatprep.subr.bf16.mxu0 0
        %1061 = vmatpush1.bf16.xpose.msra.mxu0 0
        %1062 = vmatprep.subr.bf16.mxu0 0
        %1063 = vmatpush1.bf16.xpose.msra.mxu0 0
        %1064 = vmatprep.subr.bf16.mxu0 0
        %1065 = vmatpush1.bf16.xpose.msra.mxu0 0
        %1066 = vmatprep.subr.bf16.mxu0 0
        %1067 = vmatpush1.bf16.xpose.msra.mxu0 0
        %1068 = vmatprep.subr.bf16.mxu0 0
        %1069 = vmatpush1.bf16.xpose.msra.mxu0 0
        %1070 = vmatprep.subr.bf16.mxu0 0
        %1071 = vmatpush1.bf16.xpose.msra.mxu0 %v1054
        %1072 = vmatprep.subr.bf16.mxu0 0
        %1073 = vmatpush2.bf16.xpose.msra.mxu0 0
        %1074 = vmatprep.subr.bf16.mxu0 0
        %1075 = vmatpush2.bf16.xpose.msra.mxu0 0
        %1076 = vmatprep.subr.bf16.mxu0 0
        %1077 = vmatpush2.bf16.xpose.msra.mxu0 0
        %1078 = vmatprep.subr.bf16.mxu0 0
        %1079 = vmatpush2.bf16.xpose.msra.mxu0 0
        %1080 = vmatprep.subr.bf16.mxu0 0
        %1081 = vmatpush2.bf16.xpose.msra.mxu0 0
        %1082 = vmatprep.subr.bf16.mxu0 0
        %1083 = vmatpush2.bf16.xpose.msra.mxu0 0
        %1084 = vmatprep.subr.bf16.mxu0 0
        %1085 = vmatpush2.bf16.xpose.msra.mxu0 0
        %1086 = vmatprep.subr.bf16.mxu0 0
        %1087 = vmatpush2.bf16.xpose.msra.mxu0 0
        %1088 = vmatprep.mubr.bf16.mxu0 0
        %1089 = vmatmul.mubr.bf16.gmra.mxu0 %v1051
        %v1090 = vpop.f32.mrf.mxu0
        %v1091 = vadd.f32 0.0, %v1090
        %v1092 = vpop.f32.mrf.mxu0
        %v1093 = vpop.f32.mrf.mxu0
        %v1094 = vpop.f32.mrf.mxu0
        %1095 = vdwg.mxu0
        %v1096 = vsel %vm704, %v1091, -inf
        %1097 = vmax.xlane.f32.xlu0 %v1096
        %v1098 = vpop.xlane.xlu0 %1097
        %v1099 = vsub.f32 %v1091, %v1098
        %v1100 = vmul.f32 %v1099, 1.442695
        %v1101 = vpow.pop %v1100
        %v1102 = vsel %vm704, %v1101, 0.0
        %1103 = vadd.xlane.f32.xlu0 %v1102
        %v1104 = vpop.xlane.xlu0 %1103
        %v1105 = vpack.c.bf16 %v1101, %v1101
        %v1107 = vsel %vm704, %v1105, 0
        %v1110 = vsel %vm764, %v1047, 0
        %1112 = vmatprep.subr.bf16.mxu0 0
        %1113 = vmatpush1.bf16.msra.mxu0 0
        %1114 = vmatprep.subr.bf16.mxu0 0
        %1115 = vmatpush1.bf16.msra.mxu0 0
        %1116 = vmatprep.subr.bf16.mxu0 0
        %1117 = vmatpush1.bf16.msra.mxu0 0
        %1118 = vmatprep.subr.bf16.mxu0 0
        %1119 = vmatpush1.bf16.msra.mxu0 0
        %1120 = vmatprep.subr.bf16.mxu0 0
        %1121 = vmatpush1.bf16.msra.mxu0 0
        %1122 = vmatprep.subr.bf16.mxu0 0
        %1123 = vmatpush1.bf16.msra.mxu0 0
        %1124 = vmatprep.subr.bf16.mxu0 0
        %1125 = vmatpush1.bf16.msra.mxu0 0
        %1126 = vmatprep.subr.bf16.mxu0 0
        %1127 = vmatpush1.bf16.msra.mxu0 %v1110
        %1128 = vmatprep.subr.bf16.mxu0 0
        %1129 = vmatpush2.bf16.msra.mxu0 0
        %1130 = vmatprep.subr.bf16.mxu0 0
        %1131 = vmatpush2.bf16.msra.mxu0 0
        %1132 = vmatprep.subr.bf16.mxu0 0
        %1133 = vmatpush2.bf16.msra.mxu0 0
        %1134 = vmatprep.subr.bf16.mxu0 0
        %1135 = vmatpush2.bf16.msra.mxu0 0
        %1136 = vmatprep.subr.bf16.mxu0 0
        %1137 = vmatpush2.bf16.msra.mxu0 0
        %1138 = vmatprep.subr.bf16.mxu0 0
        %1139 = vmatpush2.bf16.msra.mxu0 0
        %1140 = vmatprep.subr.bf16.mxu0 0
        %1141 = vmatpush2.bf16.msra.mxu0 0
        %1142 = vmatprep.subr.bf16.mxu0 0
        %1143 = vmatpush2.bf16.msra.mxu0 0
        %1144 = vmatprep.mubr.bf16.mxu0 0
        %1145 = vmatmul.mubr.bf16.gmra.mxu0 %v1107
        %v1146 = vpop.f32.mrf.mxu0
        %v1147 = vadd.f32 0.0, %v1146
        %v1148 = vpop.f32.mrf.mxu0
        %v1149 = vpop.f32.mrf.mxu0
        %v1150 = vpop.f32.mrf.mxu0
        %1151 = vdwg.mxu0
        %v1152 = vrcp.pop %v1104
        %v1153 = vmul.f32 %v1147, %v1152
        %1155 = vrot.lane.b32.xlu0 %v1153, 24
        %v1156 = vpop.permute.xlu0 %1155
        %vm1158 = vcmask 261312
        %1159 = vst.msk [vmem:[%s447] sm:$0xff] %vm1158, %v1156
        %s1160 = sand.u32 %s257, 1
        %s1161 = scalar_lea.sflag [#allocation6], %s1160
        %s1162 = sand.u32 %s257, 1
        %s1163 = smul.addr %s1162, 8
        %s1164 = scalar_lea.vmem [#allocation15], %s1163
        // Predicated region
        $region85: #{tpu_custom_call.1} parent=55 // pred_check
          %p1165 = pneg %p267
        $region86: #{tpu_custom_call.1} parent=55 // pred_check_branch
          %1167 = sbr.rel (%p1165) target = $region88
        $region87: #{tpu_custom_call.1} parent=55 // pred_region
          %s1169 = ssub.s32 128, 128
          %1170 = vsyncadd %s1161, %s1169
          %s1171 = sadd.s32 %s34, %s33
          %s1172 = smul.addr %s1171, 128
          %s1173 = scalar_lea.hbm %s9, %s1172
          %s1175 = sshll.u32 %s1164, 4
          %s1176 = int_to_ptr.vmem [resolvable:$true] %s1175
          %1178 = dma.vmem_to_hbm [thread:$0]  %s1176, 128, %s1173, %s1161
        $region88: #{tpu_custom_call.1} parent=55 // pred_fallthru
          _
      $region56: #{tpu_custom_call.1} parent=5 // pred_fallthru
        _
      %p1179 = scmp.le.s32.totalorder 2, %s24
      // Predicated region
      $region89: #{tpu_custom_call.1} parent=5 // pred_check
        %p1180 = pneg %p1179
      $region90: #{tpu_custom_call.1} parent=5 // pred_check_branch
        %1182 = sbr.rel (%p1180) target = $region92
      $region91: #{tpu_custom_call.1} parent=5 // pred_region
        %s1183 = ssub.s32 %s24, 2
        // Predicated region
        $region93: #{tpu_custom_call.1} parent=91 // pred_check
          %p1184 = pneg %p273
        $region94: #{tpu_custom_call.1} parent=91 // pred_check_branch
          %1186 = sbr.rel (%p1184) target = $region96
        $region95: #{tpu_custom_call.1} parent=91 // pred_region
          %s1187 = sand.u32 %s258, 1
          %s1188 = scalar_lea.sflag [#allocation6], %s1187
          %s1189 = sand.u32 %s258, 1
          %s1190 = smul.addr %s1189, 8
          %s1191 = scalar_lea.vmem [#allocation15], %s1190
          %1192 = dma.done %s1188, 128
        $region96: #{tpu_custom_call.1} parent=91 // pred_fallthru
          _
      $region92: #{tpu_custom_call.1} parent=5 // pred_fallthru
        _
    $region6: #{tpu_custom_call.1} parent=1 // loop_footer
      %s28 = sadd.s32 1, %s24
    $region7: #{tpu_custom_call.1} parent=1 // loop_footer_branch
      %23 = sbr.rel target = $region3
    $region8: #{tpu_custom_call.1} parent=1 // loop_exit
      _
    %1193 = vsyncpa [#allocation5], 1
    %s1194 = scalar_lea.sflag [#allocation5], 1
    %1195 = vsyncpa %s1194, 1
    %1196 = vsyncpa [#allocation8], 1
    %1197 = vsyncpa [#allocation11], 1
    %1198 = vsyncpa [#allocation14], 1
    %1199 = vsyncpa [#allocation6], 1
    %s1200 = scalar_lea.sflag [#allocation6], 1
    %1201 = vsyncpa %s1200, 1

</llo_original>
